<compile_context>
chip_gen: v7x
topology: tpu7x:2x2x1
jax: 0.10.0
libtpu: 0.0.40
codegen_flags: <defaults>
</compile_context>

<pallas_src>
import functools

import jax
import jax.numpy as jnp
from jax.experimental import pallas as pl
from jax.experimental.pallas import tpu as pltpu


def _round_up(n, m):
    return ((n + m - 1) // m) * m


def _choose_tm(m, tm_max=512):
    """Row tile: >=4 tiles when possible (megacore + pipelining), 512 cap."""
    quarter = _round_up(max(1, pl.cdiv(m, 4)), 8)
    return max(8, min(tm_max, quarter))


def _vmem_limit(tile_bytes):
    """Per-call scoped VMEM limit: ~4x one tile-set (double buffering + slack),
    clamped to stay inside v7x's 64 MiB physical VMEM."""
    return int(min(max(4 * tile_bytes + (4 << 20), 16 << 20), 40 << 20))


# --------------------------------------------------------------------------- #
# Pallas kernels
# --------------------------------------------------------------------------- #
def _matmul_lrelu_kernel(x_ref, w_ref, o_ref):
    """(tm, K)bf16 @ (K, N)bf16 on the MXU (f32 accumulate) + LeakyReLU(0.2)."""
    y = jnp.dot(x_ref[...], w_ref[...], preferred_element_type=jnp.float32)
    o_ref[...] = jnp.where(y > 0, y, 0.2 * y).astype(o_ref.dtype)


def _matmul_stats_kernel(x_ref, w_ref, stat_ref):
    """BN pass 1: tiled matmul, emit per-tile partial column sum (sublane 0)
    and sum-of-squares (sublane 1) only -- no activation written to HBM."""
    y = jnp.dot(x_ref[...], w_ref[...], preferred_element_type=jnp.float32)
    n = y.shape[-1]
    s = jnp.sum(y, axis=0, keepdims=True)          # (1, Np)
    sq = jnp.sum(y * y, axis=0, keepdims=True)     # (1, Np)
    stat_ref[...] = jnp.concatenate(
        [s, sq, jnp.zeros((6, n), jnp.float32)], axis=0)[None]   # (1, 8, Np)


def _matmul_bn_lrelu_kernel(x_ref, w_ref, scale_ref, shift_ref, o_ref):
    """BN pass 2: recompute the matmul, apply precomputed per-channel
    scale/shift, then LeakyReLU(0.2)."""
    y = jnp.dot(x_ref[...], w_ref[...], preferred_element_type=jnp.float32)
    y = y * scale_ref[...] + shift_ref[...]
    o_ref[...] = jnp.where(y > 0, y, 0.2 * y).astype(o_ref.dtype)


# --------------------------------------------------------------------------- #
# im2col / weight layout helpers (XLA side)
# --------------------------------------------------------------------------- #
def _im2col(x_nhwc, kh, kw, stride, pad, mp=None, kp=None):
    """x: (B,H,W,C) -> bf16 patches (M, K) [optionally padded to (mp, kp)].

    TODO(synk): the kh*kw gather is still materialized in HBM by XLA; folding
    it into the kernel (strided-slice matmul accumulation) is not done.
    """
    B, H, W, C = x_nhwc.shape
    OH = (H + 2 * pad - kh) // stride + 1
    OW = (W + 2 * pad - kw) // stride + 1
    xp = jnp.pad(x_nhwc, ((0, 0), (pad, pad), (pad, pad), (0, 0)))
    pieces = [xp[:, i:i + stride * OH:stride, j:j + stride * OW:stride, :]
              for i in range(kh) for j in range(kw)]
    p = jnp.stack(pieces, axis=3).reshape(B * OH * OW, kh * kw * C)
    p = p.astype(jnp.bfloat16)
    if mp is not None:
        M, K = p.shape
        p = jnp.pad(p, ((0, mp - M), (0, kp - K)))   # single pad, bf16
    return p, OH, OW


def _w_to_mat(w_oihw):
    """(Cout, Cin, KH, KW) -> (KH*KW*Cin, Cout), matching im2col ordering."""
    cout, cin, kh, kw = w_oihw.shape
    return jnp.transpose(w_oihw, (2, 3, 1, 0)).reshape(kh * kw * cin, cout)


def _conv_geometry(x_nhwc, w_oihw, stride, pad):
    B, H, W, _ = x_nhwc.shape
    cout, cin, kh, kw = w_oihw.shape
    OH = (H + 2 * pad - kh) // stride + 1
    OW = (W + 2 * pad - kw) // stride + 1
    M, K = B * OH * OW, kh * kw * cin
    Kp, Np = _round_up(K, 128), _round_up(cout, 128)
    tm = _choose_tm(M)
    grid_m = pl.cdiv(M, tm)
    Mp = grid_m * tm
    return (B, OH, OW, cout, kh, kw, M, K, Kp, Np, tm, grid_m, Mp)


# --------------------------------------------------------------------------- #
# Pallas wrappers
# --------------------------------------------------------------------------- #
def conv2d_lrelu(x_nhwc, w_oihw, *, stride, pad, out_dtype=jnp.bfloat16):
    """Conv-as-matmul + LeakyReLU(0.2), tiled over M, lane-dense padded N/K."""
    (B, OH, OW, cout, kh, kw, M, K, Kp, Np, tm, grid_m, Mp) = _conv_geometry(
        x_nhwc, w_oihw, stride, pad)

    patches, _, _ = _im2col(x_nhwc, kh, kw, stride, pad, mp=Mp, kp=Kp)
    w = jnp.pad(_w_to_mat(w_oihw).astype(jnp.bfloat16),
                ((0, Kp - K), (0, Np - cout)))

    out_b = jnp.dtype(out_dtype).itemsize
    tile_bytes = tm * Kp * 2 + Kp * Np * 2 + tm * Np * out_b
    cost = pl.CostEstimate(
        flops=2 * Mp * Kp * Np + 2 * Mp * Np,
        transcendentals=0,
        bytes_accessed=Mp * Kp * 2 + Kp * Np * 2 + Mp * Np * out_b,
    )
    out = pl.pallas_call(
        _matmul_lrelu_kernel,
        out_shape=jax.ShapeDtypeStruct((Mp, Np), out_dtype),
        grid_spec=pltpu.PrefetchScalarGridSpec(
            num_scalar_prefetch=0,
            grid=(grid_m,),
            in_specs=[
                pl.BlockSpec((tm, Kp), lambda i: (i, 0)),
                pl.BlockSpec((Kp, Np), lambda i: (0, 0)),   # weight resident
            ],
            out_specs=pl.BlockSpec((tm, Np), lambda i: (i, 0)),
        ),
        compiler_params=pltpu.CompilerParams(
            dimension_semantics=("parallel",),
            vmem_limit_bytes=_vmem_limit(tile_bytes),
        ),
        cost_estimate=cost,
    )(patches, w)
    return out[:M, :cout].reshape(B, OH, OW, cout)


def conv2d_bn_lrelu(x_nhwc, w_oihw, gamma, beta, *, stride, pad, eps=1e-5,
                    out_dtype=jnp.bfloat16):
    """Conv-as-matmul + batch-stat BatchNorm + LeakyReLU.

    Two tiled passes; no f32 activation round trip (pass 2 recomputes the
    matmul, which is cheaper than re-reading Mp*Np*4 bytes for these K)."""
    (B, OH, OW, cout, kh, kw, M, K, Kp, Np, tm, grid_m, Mp) = _conv_geometry(
        x_nhwc, w_oihw, stride, pad)

    patches, _, _ = _im2col(x_nhwc, kh, kw, stride, pad, mp=Mp, kp=Kp)
    w = jnp.pad(_w_to_mat(w_oihw).astype(jnp.bfloat16),
                ((0, Kp - K), (0, Np - cout)))

    # ---- pass 1: tiled matmul -> per-tile partial stats (tiny output) -------
    tile1 = tm * Kp * 2 + Kp * Np * 2 + 8 * Np * 4
    cost1 = pl.CostEstimate(
        flops=2 * Mp * Kp * Np + 3 * Mp * Np,
        transcendentals=0,
        bytes_accessed=Mp * Kp * 2 + Kp * Np * 2 + grid_m * 8 * Np * 4,
    )
    stats = pl.pallas_call(
        _matmul_stats_kernel,
        out_shape=jax.ShapeDtypeStruct((grid_m, 8, Np), jnp.float32),
        grid_spec=pltpu.PrefetchScalarGridSpec(
            num_scalar_prefetch=0,
            grid=(grid_m,),
            in_specs=[
                pl.BlockSpec((tm, Kp), lambda i: (i, 0)),
                pl.BlockSpec((Kp, Np), lambda i: (0, 0)),
            ],
            out_specs=pl.BlockSpec((1, 8, Np), lambda i: (i, 0, 0)),
        ),
        compiler_params=pltpu.CompilerParams(
            dimension_semantics=("parallel",),
            vmem_limit_bytes=_vmem_limit(tile1),
        ),
        cost_estimate=cost1,
    )(patches, w)

    # ---- global stats from partials (f32; padded rows/cols contribute 0) ----
    total = jnp.sum(stats[:, 0, :], axis=0)
    total_sq = jnp.sum(stats[:, 1, :], axis=0)
    mean = total / M
    var = jnp.maximum(total_sq / M - mean * mean, 0.0)      # biased variance
    inv = jax.lax.rsqrt(var + eps)
    gamma_p = jnp.pad(gamma.astype(jnp.float32), (0, Np - cout))
    beta_p = jnp.pad(beta.astype(jnp.float32), (0, Np - cout))
    scale = (gamma_p * inv).reshape(1, Np)
    shift = (beta_p - mean * gamma_p * inv).reshape(1, Np)

    # ---- pass 2: recompute matmul + scale/shift + LeakyReLU -----------------
    out_b = jnp.dtype(out_dtype).itemsize
    tile2 = tm * Kp * 2 + Kp * Np * 2 + 2 * Np * 4 + tm * Np * out_b
    cost2 = pl.CostEstimate(
        flops=2 * Mp * Kp * Np + 4 * Mp * Np,
        transcendentals=0,
        bytes_accessed=Mp * Kp * 2 + Kp * Np * 2 + 2 * Np * 4 + Mp * Np * out_b,
    )
    out = pl.pallas_call(
        _matmul_bn_lrelu_kernel,
        out_shape=jax.ShapeDtypeStruct((Mp, Np), out_dtype),
        grid_spec=pltpu.PrefetchScalarGridSpec(
            num_scalar_prefetch=0,
            grid=(grid_m,),
            in_specs=[
                pl.BlockSpec((tm, Kp), lambda i: (i, 0)),
                pl.BlockSpec((Kp, Np), lambda i: (0, 0)),
                pl.BlockSpec((1, Np), lambda i: (0, 0)),     # per-channel scale
                pl.BlockSpec((1, Np), lambda i: (0, 0)),     # per-channel shift
            ],
            out_specs=pl.BlockSpec((tm, Np), lambda i: (i, 0)),
        ),
        compiler_params=pltpu.CompilerParams(
            dimension_semantics=("parallel",),
            vmem_limit_bytes=_vmem_limit(tile2),
        ),
        cost_estimate=cost2,
    )(patches, w, scale, shift)
    return out[:M, :cout].reshape(B, OH, OW, cout)


# --------------------------------------------------------------------------- #
# Parameters + forward pass
# --------------------------------------------------------------------------- #
def init_params(key, ndf, num_classes):
    k1, k2, k3, k4 = jax.random.split(key, 4)
    return {
        # PyTorch conv weight layout (Cout, Cin, KH, KW), bias=False everywhere.
        "w1": jax.random.normal(k1, (ndf, 1 + num_classes, 4, 4), jnp.float32) * 0.05,
        "w2": jax.random.normal(k2, (ndf * 2, ndf, 4, 4), jnp.float32) * 0.05,
        "w3": jax.random.normal(k3, (ndf * 4, ndf * 2, 3, 3), jnp.float32) * 0.05,
        "w4": jax.random.normal(k4, (1, ndf * 4, 4, 4), jnp.float32) * 0.05,
        # BatchNorm2d default init: weight=1, bias=0.
        "bn2_g": jnp.ones((ndf * 2,), jnp.float32),
        "bn2_b": jnp.zeros((ndf * 2,), jnp.float32),
        "bn3_g": jnp.ones((ndf * 4,), jnp.float32),
        "bn3_b": jnp.zeros((ndf * 4,), jnp.float32),
    }


def discriminator_forward(params, x_nchw, labels, num_classes):
    B, _, H, W = x_nchw.shape

    # One-hot label planes + channel concat (PyTorch scatter_ over dim=1), bf16.
    # TODO(synk): layer-1 could fold the constant one-hot planes into a
    #             per-class bias table instead of extra input channels.
    onehot = jax.nn.one_hot(labels, num_classes, dtype=jnp.bfloat16)     # (B, C)
    onehot_hw = jnp.broadcast_to(onehot[:, None, None, :], (B, H, W, num_classes))
    x = jnp.concatenate(
        [jnp.transpose(x_nchw, (0, 2, 3, 1)).astype(jnp.bfloat16), onehot_hw], axis=-1)

    # Layer 1: Conv(1+nc -> ndf, 4, 2, 1) + LeakyReLU(0.2)   [Dropout = identity]
    x = conv2d_lrelu(x, params["w1"], stride=2, pad=1)

    # Layer 2: Conv(ndf -> 2ndf, 4, 2, 1) + BN + LeakyReLU   [Dropout = identity]
    x = conv2d_bn_lrelu(x, params["w2"], params["bn2_g"], params["bn2_b"],
                        stride=2, pad=1)

    # Layer 3: Conv(2ndf -> 4ndf, 3, 2, 1) + BN + LeakyReLU  [Dropout = identity]
    x = conv2d_bn_lrelu(x, params["w3"], params["bn3_g"], params["bn3_b"],
                        stride=2, pad=1)

    # Layer 4: Conv(4ndf -> 1, 4, 1, 0) + Sigmoid on a 1x1 output.
    # N=1 GEMV: done in plain XLA (exact sigmoid) per the performance review --
    # a padded Pallas call would waste 127/128 MXU columns plus launch/pad cost.
    p4, _, _ = _im2col(x, 4, 4, 1, 0)                       # (B, 16*4ndf) bf16
    logits = jnp.dot(p4.astype(jnp.float32),
                     _w_to_mat(params["w4"]).astype(jnp.float32))   # (B, 1)
    return jax.nn.sigmoid(logits).reshape(-1)               # matches output.view(-1)


# --------------------------------------------------------------------------- #
if __name__ == "__main__":
    NDF, NUM_CLASSES = 8, 4
    B, H, W = 2, 32, 32          # 32x32 so the 4-conv stack reduces to 1x1

    key = jax.random.PRNGKey(0)
    kx, kl, kp = jax.random.split(key, 3)

    x = jax.random.normal(kx, (B, 1, H, W), jnp.float32)        # NCHW, like PyTorch
    labels = jax.random.randint(kl, (B,), 0, NUM_CLASSES, jnp.int32)
    params = init_params(kp, NDF, NUM_CLASSES)

    fwd = jax.jit(functools.partial(discriminator_forward, num_classes=NUM_CLASSES))
    out = fwd(params, x, labels)
    out = jax.block_until_ready(out)

    assert out.shape == (B,), out.shape
    assert bool(jnp.all(jnp.isfinite(out)))
    print("KERNEL_OK")
</pallas_src>

<mosaic_0001>
module attributes {stable_mosaic.version = 11 : i64} {
  func.func @_matmul_lrelu_kernel(%arg0: i32, %arg1: memref<128x128xbf16, #tpu.memory_space<vmem>>, %arg2: memref<128x128xbf16, #tpu.memory_space<vmem>>, %arg3: memref<128x128xbf16, #tpu.memory_space<vmem>>) attributes {dimension_semantics = [#tpu.dimension_semantics<parallel>], iteration_bounds = array<i64: 4>, scalar_prefetch = 0 : i64, scratch_operands = 0 : i64, tpu.core_type = #tpu.core_type<tc>, window_params = [{transform_indices = @transform_0, window_bounds = array<i64: 128, 128>}, {pipeline_mode = #tpu.pipeline_mode<synchronous>, transform_indices = @transform_1, window_bounds = array<i64: 128, 128>}, {transform_indices = @transform_2, window_bounds = array<i64: 128, 128>}]} {
    %c0 = arith.constant 0 : index
    %c0_0 = arith.constant 0 : index
    %0 = vector.load %arg1[%c0, %c0_0] : memref<128x128xbf16, #tpu.memory_space<vmem>>, vector<128x128xbf16>
    %c0_1 = arith.constant 0 : index
    %c0_2 = arith.constant 0 : index
    %1 = vector.load %arg2[%c0_1, %c0_2] : memref<128x128xbf16, #tpu.memory_space<vmem>>, vector<128x128xbf16>
    %cst = arith.constant dense<0.000000e+00> : vector<128x128xf32>
    %2 = tpu.matmul %0, %1, %cst {dimension_numbers = #tpu.dot_dimension_numbers<[1], [0], [0], [1], [0, 0, 1, 1], [], []>} : vector<128x128xbf16>, vector<128x128xbf16>, vector<128x128xf32> -> vector<128x128xf32>
    %cst_3 = arith.constant 0.000000e+00 : f32
    %3 = vector.broadcast %cst_3 : f32 to vector<128x128xf32>
    %4 = arith.cmpf ogt, %2, %3 : vector<128x128xf32>
    %cst_4 = arith.constant 2.000000e-01 : f32
    %5 = vector.broadcast %cst_4 : f32 to vector<128x128xf32>
    %6 = arith.mulf %5, %2 : vector<128x128xf32>
    %7 = arith.select %4, %2, %6 : vector<128x128xi1>, vector<128x128xf32>
    %8 = arith.truncf %7 : vector<128x128xf32> to vector<128x128xbf16>
    %c0_5 = arith.constant 0 : index
    %c0_6 = arith.constant 0 : index
    %9 = vector.load %arg3[%c0_5, %c0_6] : memref<128x128xbf16, #tpu.memory_space<vmem>>, vector<128x128xbf16>
    tpu.vector_store %arg3[%c0_5, %c0_6], %8 {strides = array<i32>} : memref<128x128xbf16, #tpu.memory_space<vmem>>, vector<128x128xbf16>,
    return
  }
  func.func @transform_0(%arg0: i32) -> (i32, i32) {
    %c0_i32 = arith.constant 0 : i32
    %c0_i32_0 = arith.constant 0 : i32
    return %arg0, %c0_i32 : i32, i32
  }
  func.func @transform_1(%arg0: i32) -> (i32, i32) {
    %c0_i32 = arith.constant 0 : i32
    %c0_i32_0 = arith.constant 0 : i32
    %c0_i32_1 = arith.constant 0 : i32
    return %c0_i32, %c0_i32_0 : i32, i32
  }
  func.func @transform_2(%arg0: i32) -> (i32, i32) {
    %c0_i32 = arith.constant 0 : i32
    %c0_i32_0 = arith.constant 0 : i32
    return %arg0, %c0_i32 : i32, i32
  }
}

module attributes {stable_mosaic.version = 11 : i64} {
  func.func @_matmul_stats_kernel(%arg0: i32, %arg1: memref<32x128xbf16, #tpu.memory_space<vmem>>, %arg2: memref<128x128xbf16, #tpu.memory_space<vmem>>, %arg3: memref<1x8x128xf32, #tpu.memory_space<vmem>>) attributes {dimension_semantics = [#tpu.dimension_semantics<parallel>], iteration_bounds = array<i64: 4>, scalar_prefetch = 0 : i64, scratch_operands = 0 : i64, tpu.core_type = #tpu.core_type<tc>, window_params = [{transform_indices = @transform_0, window_bounds = array<i64: 32, 128>}, {pipeline_mode = #tpu.pipeline_mode<synchronous>, transform_indices = @transform_1, window_bounds = array<i64: 128, 128>}, {transform_indices = @transform_2, window_bounds = array<i64: 1, 8, 128>}]} {
    %c0 = arith.constant 0 : index
    %c0_0 = arith.constant 0 : index
    %0 = vector.load %arg1[%c0, %c0_0] : memref<32x128xbf16, #tpu.memory_space<vmem>>, vector<32x128xbf16>
    %c0_1 = arith.constant 0 : index
    %c0_2 = arith.constant 0 : index
    %1 = vector.load %arg2[%c0_1, %c0_2] : memref<128x128xbf16, #tpu.memory_space<vmem>>, vector<128x128xbf16>
    %cst = arith.constant dense<0.000000e+00> : vector<32x128xf32>
    %2 = tpu.matmul %0, %1, %cst {dimension_numbers = #tpu.dot_dimension_numbers<[1], [0], [0], [1], [0, 0, 1, 1], [], []>} : vector<32x128xbf16>, vector<128x128xbf16>, vector<32x128xf32> -> vector<32x128xf32>
    %cst_3 = arith.constant dense<0.000000e+00> : vector<128xf32>
    %3 = vector.multi_reduction <add>, %2, %cst_3 [0] : vector<32x128xf32> to vector<128xf32>
    %4 = vector.shape_cast %3 : vector<128xf32> to vector<1x128xf32>
    %5 = arith.mulf %2, %2 : vector<32x128xf32>
    %cst_4 = arith.constant dense<0.000000e+00> : vector<128xf32>
    %6 = vector.multi_reduction <add>, %5, %cst_4 [0] : vector<32x128xf32> to vector<128xf32>
    %7 = vector.shape_cast %6 : vector<128xf32> to vector<1x128xf32>
    %cst_5 = arith.constant 0.000000e+00 : f32
    %8 = vector.broadcast %cst_5 : f32 to vector<6x128xf32>
    %9 = tpu.concatenate %4, %7, %8 in 0 : vector<1x128xf32>, vector<1x128xf32>, vector<6x128xf32> -> vector<8x128xf32>
    %10 = vector.shape_cast %9 : vector<8x128xf32> to vector<1x8x128xf32>
    %c0_6 = arith.constant 0 : index
    %c0_7 = arith.constant 0 : index
    %c0_8 = arith.constant 0 : index
    %11 = vector.load %arg3[%c0_6, %c0_7, %c0_8] : memref<1x8x128xf32, #tpu.memory_space<vmem>>, vector<1x8x128xf32>
    tpu.vector_store %arg3[%c0_6, %c0_7, %c0_8], %10 {strides = array<i32>} : memref<1x8x128xf32, #tpu.memory_space<vmem>>, vector<1x8x128xf32>,
    return
  }
  func.func @transform_0(%arg0: i32) -> (i32, i32) {
    %c0_i32 = arith.constant 0 : i32
    %c0_i32_0 = arith.constant 0 : i32
    return %arg0, %c0_i32 : i32, i32
  }
  func.func @transform_1(%arg0: i32) -> (i32, i32) {
    %c0_i32 = arith.constant 0 : i32
    %c0_i32_0 = arith.constant 0 : i32
    %c0_i32_1 = arith.constant 0 : i32
    return %c0_i32, %c0_i32_0 : i32, i32
  }
  func.func @transform_2(%arg0: i32) -> (i32, i32, i32) {
    %c0_i32 = arith.constant 0 : i32
    %c0_i32_0 = arith.constant 0 : i32
    %c0_i32_1 = arith.constant 0 : i32
    return %arg0, %c0_i32, %c0_i32_0 : i32, i32, i32
  }
}

module attributes {stable_mosaic.version = 11 : i64} {
  func.func @_matmul_bn_lrelu_kernel(%arg0: i32, %arg1: memref<32x128xbf16, #tpu.memory_space<vmem>>, %arg2: memref<128x128xbf16, #tpu.memory_space<vmem>>, %arg3: memref<1x128xf32, #tpu.memory_space<vmem>>, %arg4: memref<1x128xf32, #tpu.memory_space<vmem>>, %arg5: memref<32x128xbf16, #tpu.memory_space<vmem>>) attributes {dimension_semantics = [#tpu.dimension_semantics<parallel>], iteration_bounds = array<i64: 4>, scalar_prefetch = 0 : i64, scratch_operands = 0 : i64, tpu.core_type = #tpu.core_type<tc>, window_params = [{transform_indices = @transform_0, window_bounds = array<i64: 32, 128>}, {pipeline_mode = #tpu.pipeline_mode<synchronous>, transform_indices = @transform_1, window_bounds = array<i64: 128, 128>}, {pipeline_mode = #tpu.pipeline_mode<synchronous>, transform_indices = @transform_2, window_bounds = array<i64: 1, 128>}, {pipeline_mode = #tpu.pipeline_mode<synchronous>, transform_indices = @transform_3, window_bounds = array<i64: 1, 128>}, {transform_indices = @transform_4, window_bounds = array<i64: 32, 128>}]} {
    %c0 = arith.constant 0 : index
    %c0_0 = arith.constant 0 : index
    %0 = vector.load %arg1[%c0, %c0_0] : memref<32x128xbf16, #tpu.memory_space<vmem>>, vector<32x128xbf16>
    %c0_1 = arith.constant 0 : index
    %c0_2 = arith.constant 0 : index
    %1 = vector.load %arg2[%c0_1, %c0_2] : memref<128x128xbf16, #tpu.memory_space<vmem>>, vector<128x128xbf16>
    %cst = arith.constant dense<0.000000e+00> : vector<32x128xf32>
    %2 = tpu.matmul %0, %1, %cst {dimension_numbers = #tpu.dot_dimension_numbers<[1], [0], [0], [1], [0, 0, 1, 1], [], []>} : vector<32x128xbf16>, vector<128x128xbf16>, vector<32x128xf32> -> vector<32x128xf32>
    %c0_3 = arith.constant 0 : index
    %c0_4 = arith.constant 0 : index
    %3 = vector.load %arg3[%c0_3, %c0_4] : memref<1x128xf32, #tpu.memory_space<vmem>>, vector<1x128xf32>
    %4 = vector.broadcast %3 : vector<1x128xf32> to vector<32x128xf32>
    %5 = arith.mulf %2, %4 : vector<32x128xf32>
    %c0_5 = arith.constant 0 : index
    %c0_6 = arith.constant 0 : index
    %6 = vector.load %arg4[%c0_5, %c0_6] : memref<1x128xf32, #tpu.memory_space<vmem>>, vector<1x128xf32>
    %7 = vector.broadcast %6 : vector<1x128xf32> to vector<32x128xf32>
    %8 = arith.addf %5, %7 : vector<32x128xf32>
    %cst_7 = arith.constant 0.000000e+00 : f32
    %9 = vector.broadcast %cst_7 : f32 to vector<32x128xf32>
    %10 = arith.cmpf ogt, %8, %9 : vector<32x128xf32>
    %cst_8 = arith.constant 2.000000e-01 : f32
    %11 = vector.broadcast %cst_8 : f32 to vector<32x128xf32>
    %12 = arith.mulf %11, %8 : vector<32x128xf32>
    %13 = arith.select %10, %8, %12 : vector<32x128xi1>, vector<32x128xf32>
    %14 = arith.truncf %13 : vector<32x128xf32> to vector<32x128xbf16>
    %c0_9 = arith.constant 0 : index
    %c0_10 = arith.constant 0 : index
    %15 = vector.load %arg5[%c0_9, %c0_10] : memref<32x128xbf16, #tpu.memory_space<vmem>>, vector<32x128xbf16>
    tpu.vector_store %arg5[%c0_9, %c0_10], %14 {strides = array<i32>} : memref<32x128xbf16, #tpu.memory_space<vmem>>, vector<32x128xbf16>,
    return
  }
  func.func @transform_0(%arg0: i32) -> (i32, i32) {
    %c0_i32 = arith.constant 0 : i32
    %c0_i32_0 = arith.constant 0 : i32
    return %arg0, %c0_i32 : i32, i32
  }
  func.func @transform_1(%arg0: i32) -> (i32, i32) {
    %c0_i32 = arith.constant 0 : i32
    %c0_i32_0 = arith.constant 0 : i32
    %c0_i32_1 = arith.constant 0 : i32
    return %c0_i32, %c0_i32_0 : i32, i32
  }
  func.func @transform_2(%arg0: i32) -> (i32, i32) {
    %c0_i32 = arith.constant 0 : i32
    %c0_i32_0 = arith.constant 0 : i32
    %c0_i32_1 = arith.constant 0 : i32
    return %c0_i32, %c0_i32_0 : i32, i32
  }
  func.func @transform_3(%arg0: i32) -> (i32, i32) {
    %c0_i32 = arith.constant 0 : i32
    %c0_i32_0 = arith.constant 0 : i32
    %c0_i32_1 = arith.constant 0 : i32
    return %c0_i32, %c0_i32_0 : i32, i32
  }
  func.func @transform_4(%arg0: i32) -> (i32, i32) {
    %c0_i32 = arith.constant 0 : i32
    %c0_i32_0 = arith.constant 0 : i32
    return %arg0, %c0_i32 : i32, i32
  }
}

module attributes {stable_mosaic.version = 11 : i64} {
  func.func @_matmul_stats_kernel(%arg0: i32, %arg1: memref<8x256xbf16, #tpu.memory_space<vmem>>, %arg2: memref<256x128xbf16, #tpu.memory_space<vmem>>, %arg3: memref<1x8x128xf32, #tpu.memory_space<vmem>>) attributes {dimension_semantics = [#tpu.dimension_semantics<parallel>], iteration_bounds = array<i64: 4>, scalar_prefetch = 0 : i64, scratch_operands = 0 : i64, tpu.core_type = #tpu.core_type<tc>, window_params = [{transform_indices = @transform_0, window_bounds = array<i64: 8, 256>}, {pipeline_mode = #tpu.pipeline_mode<synchronous>, transform_indices = @transform_1, window_bounds = array<i64: 256, 128>}, {transform_indices = @transform_2, window_bounds = array<i64: 1, 8, 128>}]} {
    %c0 = arith.constant 0 : index
    %c0_0 = arith.constant 0 : index
    %0 = vector.load %arg1[%c0, %c0_0] : memref<8x256xbf16, #tpu.memory_space<vmem>>, vector<8x256xbf16>
    %c0_1 = arith.constant 0 : index
    %c0_2 = arith.constant 0 : index
    %1 = vector.load %arg2[%c0_1, %c0_2] : memref<256x128xbf16, #tpu.memory_space<vmem>>, vector<256x128xbf16>
    %cst = arith.constant dense<0.000000e+00> : vector<8x128xf32>
    %2 = tpu.matmul %0, %1, %cst {dimension_numbers = #tpu.dot_dimension_numbers<[1], [0], [0], [1], [0, 0, 1, 1], [], []>} : vector<8x256xbf16>, vector<256x128xbf16>, vector<8x128xf32> -> vector<8x128xf32>
    %cst_3 = arith.constant dense<0.000000e+00> : vector<128xf32>
    %3 = vector.multi_reduction <add>, %2, %cst_3 [0] : vector<8x128xf32> to vector<128xf32>
    %4 = vector.shape_cast %3 : vector<128xf32> to vector<1x128xf32>
    %5 = arith.mulf %2, %2 : vector<8x128xf32>
    %cst_4 = arith.constant dense<0.000000e+00> : vector<128xf32>
    %6 = vector.multi_reduction <add>, %5, %cst_4 [0] : vector<8x128xf32> to vector<128xf32>
    %7 = vector.shape_cast %6 : vector<128xf32> to vector<1x128xf32>
    %cst_5 = arith.constant 0.000000e+00 : f32
    %8 = vector.broadcast %cst_5 : f32 to vector<6x128xf32>
    %9 = tpu.concatenate %4, %7, %8 in 0 : vector<1x128xf32>, vector<1x128xf32>, vector<6x128xf32> -> vector<8x128xf32>
    %10 = vector.shape_cast %9 : vector<8x128xf32> to vector<1x8x128xf32>
    %c0_6 = arith.constant 0 : index
    %c0_7 = arith.constant 0 : index
    %c0_8 = arith.constant 0 : index
    %11 = vector.load %arg3[%c0_6, %c0_7, %c0_8] : memref<1x8x128xf32, #tpu.memory_space<vmem>>, vector<1x8x128xf32>
    tpu.vector_store %arg3[%c0_6, %c0_7, %c0_8], %10 {strides = array<i32>} : memref<1x8x128xf32, #tpu.memory_space<vmem>>, vector<1x8x128xf32>,
    return
  }
  func.func @transform_0(%arg0: i32) -> (i32, i32) {
    %c0_i32 = arith.constant 0 : i32
    %c0_i32_0 = arith.constant 0 : i32
    return %arg0, %c0_i32 : i32, i32
  }
  func.func @transform_1(%arg0: i32) -> (i32, i32) {
    %c0_i32 = arith.constant 0 : i32
    %c0_i32_0 = arith.constant 0 : i32
    %c0_i32_1 = arith.constant 0 : i32
    return %c0_i32, %c0_i32_0 : i32, i32
  }
  func.func @transform_2(%arg0: i32) -> (i32, i32, i32) {
    %c0_i32 = arith.constant 0 : i32
    %c0_i32_0 = arith.constant 0 : i32
    %c0_i32_1 = arith.constant 0 : i32
    return %arg0, %c0_i32, %c0_i32_0 : i32, i32, i32
  }
}

module attributes {stable_mosaic.version = 11 : i64} {
  func.func @_matmul_bn_lrelu_kernel(%arg0: i32, %arg1: memref<8x256xbf16, #tpu.memory_space<vmem>>, %arg2: memref<256x128xbf16, #tpu.memory_space<vmem>>, %arg3: memref<1x128xf32, #tpu.memory_space<vmem>>, %arg4: memref<1x128xf32, #tpu.memory_space<vmem>>, %arg5: memref<8x128xbf16, #tpu.memory_space<vmem>>) attributes {dimension_semantics = [#tpu.dimension_semantics<parallel>], iteration_bounds = array<i64: 4>, scalar_prefetch = 0 : i64, scratch_operands = 0 : i64, tpu.core_type = #tpu.core_type<tc>, window_params = [{transform_indices = @transform_0, window_bounds = array<i64: 8, 256>}, {pipeline_mode = #tpu.pipeline_mode<synchronous>, transform_indices = @transform_1, window_bounds = array<i64: 256, 128>}, {pipeline_mode = #tpu.pipeline_mode<synchronous>, transform_indices = @transform_2, window_bounds = array<i64: 1, 128>}, {pipeline_mode = #tpu.pipeline_mode<synchronous>, transform_indices = @transform_3, window_bounds = array<i64: 1, 128>}, {transform_indices = @transform_4, window_bounds = array<i64: 8, 128>}]} {
    %c0 = arith.constant 0 : index
    %c0_0 = arith.constant 0 : index
    %0 = vector.load %arg1[%c0, %c0_0] : memref<8x256xbf16, #tpu.memory_space<vmem>>, vector<8x256xbf16>
    %c0_1 = arith.constant 0 : index
    %c0_2 = arith.constant 0 : index
    %1 = vector.load %arg2[%c0_1, %c0_2] : memref<256x128xbf16, #tpu.memory_space<vmem>>, vector<256x128xbf16>
    %cst = arith.constant dense<0.000000e+00> : vector<8x128xf32>
    %2 = tpu.matmul %0, %1, %cst {dimension_numbers = #tpu.dot_dimension_numbers<[1], [0], [0], [1], [0, 0, 1, 1], [], []>} : vector<8x256xbf16>, vector<256x128xbf16>, vector<8x128xf32> -> vector<8x128xf32>
    %c0_3 = arith.constant 0 : index
    %c0_4 = arith.constant 0 : index
    %3 = vector.load %arg3[%c0_3, %c0_4] : memref<1x128xf32, #tpu.memory_space<vmem>>, vector<1x128xf32>
    %4 = vector.broadcast %3 : vector<1x128xf32> to vector<8x128xf32>
    %5 = arith.mulf %2, %4 : vector<8x128xf32>
    %c0_5 = arith.constant 0 : index
    %c0_6 = arith.constant 0 : index
    %6 = vector.load %arg4[%c0_5, %c0_6] : memref<1x128xf32, #tpu.memory_space<vmem>>, vector<1x128xf32>
    %7 = vector.broadcast %6 : vector<1x128xf32> to vector<8x128xf32>
    %8 = arith.addf %5, %7 : vector<8x128xf32>
    %cst_7 = arith.constant 0.000000e+00 : f32
    %9 = vector.broadcast %cst_7 : f32 to vector<8x128xf32>
    %10 = arith.cmpf ogt, %8, %9 : vector<8x128xf32>
    %cst_8 = arith.constant 2.000000e-01 : f32
    %11 = vector.broadcast %cst_8 : f32 to vector<8x128xf32>
    %12 = arith.mulf %11, %8 : vector<8x128xf32>
    %13 = arith.select %10, %8, %12 : vector<8x128xi1>, vector<8x128xf32>
    %14 = arith.truncf %13 : vector<8x128xf32> to vector<8x128xbf16>
    %c0_9 = arith.constant 0 : index
    %c0_10 = arith.constant 0 : index
    %15 = vector.load %arg5[%c0_9, %c0_10] : memref<8x128xbf16, #tpu.memory_space<vmem>>, vector<8x128xbf16>
    tpu.vector_store %arg5[%c0_9, %c0_10], %14 {strides = array<i32>} : memref<8x128xbf16, #tpu.memory_space<vmem>>, vector<8x128xbf16>,
    return
  }
  func.func @transform_0(%arg0: i32) -> (i32, i32) {
    %c0_i32 = arith.constant 0 : i32
    %c0_i32_0 = arith.constant 0 : i32
    return %arg0, %c0_i32 : i32, i32
  }
  func.func @transform_1(%arg0: i32) -> (i32, i32) {
    %c0_i32 = arith.constant 0 : i32
    %c0_i32_0 = arith.constant 0 : i32
    %c0_i32_1 = arith.constant 0 : i32
    return %c0_i32, %c0_i32_0 : i32, i32
  }
  func.func @transform_2(%arg0: i32) -> (i32, i32) {
    %c0_i32 = arith.constant 0 : i32
    %c0_i32_0 = arith.constant 0 : i32
    %c0_i32_1 = arith.constant 0 : i32
    return %c0_i32, %c0_i32_0 : i32, i32
  }
  func.func @transform_3(%arg0: i32) -> (i32, i32) {
    %c0_i32 = arith.constant 0 : i32
    %c0_i32_0 = arith.constant 0 : i32
    %c0_i32_1 = arith.constant 0 : i32
    return %c0_i32, %c0_i32_0 : i32, i32
  }
  func.func @transform_4(%arg0: i32) -> (i32, i32) {
    %c0_i32 = arith.constant 0 : i32
    %c0_i32_0 = arith.constant 0 : i32
    return %arg0, %c0_i32 : i32, i32
  }
}

</mosaic_0001>

<llo_original>
// kernel: discriminator_forward.5
$region0: #{discriminator_forward.5}
  #allocation0 [shape = 'u32[]', space=smem, size = 0x4, offset = 0x4, fixed_abs, tag = 'smem constant byte address 0x4 - core index']
  #allocation1 [shape = 'u32[144,128]{1,0:T(1,128)}', space=vmem, size = 0x12000, scoped, tag = 'internal scratch']
  %s0 = inlined_call_operand.vmem [shape: bf16[512,128], index: 0, kind: input, shape index: {}]
  %s1 = inlined_call_operand.vmem [shape: bf16[128,128], index: 1, kind: input, shape index: {}]
  %s2 = inlined_call_operand.vmem [shape: bf16[512,128], index: 2, kind: output, shape index: {}]
  %s3 = sld [smem:[#allocation0]]
  $region41: #{discriminator_forward.5} parent=0
    _
  %s5 = ssub.s32 1, %s3
  %s6 = scalar_select 0, %s5, %s3
  loop: start=0, step=1, limit=6
  $region2: #{discriminator_forward.5} parent=0 // loop_pre_header
    _
  $region3: #{discriminator_forward.5} parent=0 // loop_header
    %s8 = sphi 0, %s12
    %p9 = scmp.ge.s32.totalorder %s8, 6
    %s18 = sphi 0, %s20
    %s21 = sphi 0, %s18
    %s22 = sphi 0, %s21
    %s38 = sphi 0, %s22
    %s42 = sphi 0, %s42
    %s44 = sphi 0, %s42
    %s45 = sphi 0, %s44
    %s59 = sphi 0, %s45
    %s65 = sphi 0, %s67
    %s68 = sphi 0, %s65
    %s69 = sphi 0, %s68
    %s85 = sphi 0, %s69
  $region4: #{discriminator_forward.5} parent=0 // loop_header_branch
    %11 = sbr.rel (%p9) target = $region8
  $region5: #{discriminator_forward.5} parent=0 // loop_body
    %s13 = ssub.s32 %s8, 1
    %s14 = ssub.s32 %s8, 2
    %s15 = sadd.s32 %s8, 1
    %s16 = ssub.s32 %s8, %s15
    %p17 = scmp.eq.s32.totalorder %s16, 0
    %s19 = sadd.s32 %s18, 1
    %s20 = scalar_select %p17, %s18, %s19
    %p23 = pneg %p17
    %p24 = scmp.eq.s32.totalorder %s8, 3
    %p25 = por %p23, %p24
    %p26 = scmp.ne.s32.totalorder %s18, %s21
    %p27 = scmp.eq.s32.totalorder %s8, 0
    %p28 = por %p26, %p27
    %p29 = scmp.ne.s32.totalorder %s18, %s21
    %p30 = scmp.eq.s32.totalorder %s13, 3
    %p31 = por %p29, %p30
    %p32 = scmp.ne.s32.totalorder %s21, %s22
    %p33 = scmp.eq.s32.totalorder %s13, 0
    %p34 = por %p32, %p33
    %p35 = scmp.ne.s32.totalorder %s21, %s22
    %p36 = scmp.eq.s32.totalorder %s14, 3
    %p37 = por %p35, %p36
    %p39 = scmp.ne.s32.totalorder %s22, %s38
    %p40 = scmp.eq.s32.totalorder %s14, 0
    %p41 = por %p39, %p40
    %s43 = sadd.s32 %s42, 1
    %p46 = scmp.eq.s32.totalorder %s8, 3
    %p47 = scmp.ne.s32.totalorder %s42, %s44
    %p48 = scmp.eq.s32.totalorder %s8, 0
    %p49 = por %p47, %p48
    %p50 = scmp.ne.s32.totalorder %s42, %s44
    %p51 = scmp.eq.s32.totalorder %s13, 3
    %p52 = por %p50, %p51
    %p53 = scmp.ne.s32.totalorder %s44, %s45
    %p54 = scmp.eq.s32.totalorder %s13, 0
    %p55 = por %p53, %p54
    %p56 = scmp.ne.s32.totalorder %s44, %s45
    %p57 = scmp.eq.s32.totalorder %s14, 3
    %p58 = por %p56, %p57
    %p60 = scmp.ne.s32.totalorder %s45, %s59
    %p61 = scmp.eq.s32.totalorder %s14, 0
    %p62 = por %p60, %p61
    %s63 = ssub.s32 %s8, %s15
    %p64 = scmp.eq.s32.totalorder %s63, 0
    %s66 = sadd.s32 %s65, 1
    %s67 = scalar_select %p64, %s65, %s66
    %p70 = pneg %p64
    %p71 = scmp.eq.s32.totalorder %s8, 3
    %p72 = por %p70, %p71
    %p73 = scmp.ne.s32.totalorder %s65, %s68
    %p74 = scmp.eq.s32.totalorder %s8, 0
    %p75 = por %p73, %p74
    %p76 = scmp.ne.s32.totalorder %s65, %s68
    %p77 = scmp.eq.s32.totalorder %s13, 3
    %p78 = por %p76, %p77
    %p79 = scmp.ne.s32.totalorder %s68, %s69
    %p80 = scmp.eq.s32.totalorder %s13, 0
    %p81 = por %p79, %p80
    %p82 = scmp.ne.s32.totalorder %s68, %s69
    %p83 = scmp.eq.s32.totalorder %s14, 3
    %p84 = por %p82, %p83
    %p86 = scmp.ne.s32.totalorder %s69, %s85
    %p87 = scmp.eq.s32.totalorder %s14, 0
    %p88 = por %p86, %p87
    %p89 = scmp.le.s32.totalorder 1, %s8
    %p90 = scmp.lt.s32.totalorder %s8, 5
    %p91 = pnand %p89, %p90
    %p92 = pneg %p91
    // Predicated region
    $region9: #{discriminator_forward.5} parent=5 // pred_check
      _
    $region10: #{discriminator_forward.5} parent=5 // pred_check_branch
      %94 = sbr.rel (%p91) target = $region12
    $region11: #{discriminator_forward.5} parent=5 // pred_region
      %s95 = ssub.s32 %s8, 1
      // Predicated region
      $region13: #{discriminator_forward.5} parent=11 // pred_check
        %p96 = pneg %p55
      $region14: #{discriminator_forward.5} parent=11 // pred_check_branch
        %98 = sbr.rel (%p96) target = $region16
      $region15: #{discriminator_forward.5} parent=11 // pred_region
        _
      $region16: #{discriminator_forward.5} parent=11 // pred_fallthru
        _
    $region12: #{discriminator_forward.5} parent=5 // pred_fallthru
      _
    %p99 = scmp.lt.s32.totalorder %s8, 4
    // Predicated region
    $region17: #{discriminator_forward.5} parent=5 // pred_check
      %p100 = pneg %p99
    $region18: #{discriminator_forward.5} parent=5 // pred_check_branch
      %102 = sbr.rel (%p100) target = $region20
    $region19: #{discriminator_forward.5} parent=5 // pred_region
      // Predicated region
      $region21: #{discriminator_forward.5} parent=19 // pred_check
        %p103 = pneg %p28
      $region22: #{discriminator_forward.5} parent=19 // pred_check_branch
        %105 = sbr.rel (%p103) target = $region24
      $region23: #{discriminator_forward.5} parent=19 // pred_region
        %s106 = smul.u32 16, %s8
        %p107 = scmp.lt.s32.totalorder %s106, 63
        %s108 = scalar_select %p107, %s106, 63
        %s109 = smul.addr %s108, 4
        %s110 = scalar_lea.vmem %s0, %s109
        %s111 = smul.u32 16, %s8
      $region24: #{discriminator_forward.5} parent=19 // pred_fallthru
        _
    $region20: #{discriminator_forward.5} parent=5 // pred_fallthru
      _
    %p112 = scmp.le.s32.totalorder 1, %s8
    %p113 = scmp.lt.s32.totalorder %s8, 5
    %p114 = pnand %p112, %p113
    %p115 = pneg %p114
    // Predicated region
    $region25: #{discriminator_forward.5} parent=5 // pred_check
      _
    $region26: #{discriminator_forward.5} parent=5 // pred_check_branch
      %117 = sbr.rel (%p114) target = $region28
    $region27: #{discriminator_forward.5} parent=5 // pred_region
      %s118 = ssub.s32 %s8, 1
      %s119 = smul.u32 16, %s13
      %p120 = scmp.lt.s32.totalorder %s119, 63
      %s121 = scalar_select %p120, %s119, 63
      %s122 = smul.addr %s121, 4
      %s123 = scalar_lea.vmem %s0, %s122
      %p124 = pneg %p34
      %p125 = pneg %p31
      %p126 = pneg %p55
      %p127 = pneg %p52
      %p128 = pneg %p81
      %p129 = pneg %p78
      %s130 = smul.u32 16, %s13
      %p131 = scmp.lt.s32.totalorder %s130, 63
      %s132 = scalar_select %p131, %s130, 63
      %s133 = smul.addr %s132, 4
      %s134 = scalar_lea.vmem %s2, %s133
      %s135 = smul.u32 16, %s13
      %p136 = scmp.lt.s32.totalorder %s135, 63
      %s137 = scalar_select %p136, %s135, 63
      %s138 = smul.addr %s137, 4
      %s139 = scalar_lea.vmem %s0, %s138
      %s140 = smul.u32 16, %s13
      %s141 = smul.u32 16, %s13
      %p142 = scmp.lt.s32.totalorder %s141, 63
      %s143 = scalar_select %p142, %s141, 63
      %s144 = smul.addr %s143, 4
      %s145 = scalar_lea.vmem %s2, %s144
      %s146 = smul.u32 16, %s13
      %v148 = vld [vmem:[%s139] sm:$0xf]
      %v149 = vld [vmem:[%s139 + $0x4] sm:$0xf]
      %v150 = vld [vmem:[%s139 + $0x8] sm:$0xf]
      %v151 = vld [vmem:[%s139 + $0xc] sm:$0xf]
      %v152 = vld [vmem:[%s139 + $0x10] sm:$0xf]
      %v153 = vld [vmem:[%s139 + $0x14] sm:$0xf]
      %v154 = vld [vmem:[%s139 + $0x18] sm:$0xf]
      %v155 = vld [vmem:[%s139 + $0x1c] sm:$0xf]
      %v156 = vld [vmem:[%s139 + $0x20] sm:$0xf]
      %v157 = vld [vmem:[%s139 + $0x24] sm:$0xf]
      %v158 = vld [vmem:[%s139 + $0x28] sm:$0xf]
      %v159 = vld [vmem:[%s139 + $0x2c] sm:$0xf]
      %v160 = vld [vmem:[%s139 + $0x30] sm:$0xf]
      %v161 = vld [vmem:[%s139 + $0x34] sm:$0xf]
      %v162 = vld [vmem:[%s139 + $0x38] sm:$0xf]
      %v163 = vld [vmem:[%s139 + $0x3c] sm:$0xf]
      %v164 = vld [vmem:[%s1] sm:$0xf]
      %v165 = vld [vmem:[%s1 + $0x4] sm:$0xf]
      %v166 = vld [vmem:[%s1 + $0x8] sm:$0xf]
      %v167 = vld [vmem:[%s1 + $0xc] sm:$0xf]
      %v168 = vld [vmem:[%s1 + $0x10] sm:$0xf]
      %v169 = vld [vmem:[%s1 + $0x14] sm:$0xf]
      %v170 = vld [vmem:[%s1 + $0x18] sm:$0xf]
      %v171 = vld [vmem:[%s1 + $0x1c] sm:$0xf]
      %v172 = vld [vmem:[%s1 + $0x20] sm:$0xf]
      %v173 = vld [vmem:[%s1 + $0x24] sm:$0xf]
      %v174 = vld [vmem:[%s1 + $0x28] sm:$0xf]
      %v175 = vld [vmem:[%s1 + $0x2c] sm:$0xf]
      %v176 = vld [vmem:[%s1 + $0x30] sm:$0xf]
      %v177 = vld [vmem:[%s1 + $0x34] sm:$0xf]
      %v178 = vld [vmem:[%s1 + $0x38] sm:$0xf]
      %v179 = vld [vmem:[%s1 + $0x3c] sm:$0xf]
      %v196 = vunpack.c.l.b16 %v148
      %v197 = vunpack.c.l.b16 %v149
      %v198 = vunpack.c.l.b16 %v150
      %v199 = vunpack.c.l.b16 %v151
      %v200 = vunpack.c.l.b16 %v152
      %v201 = vunpack.c.l.b16 %v153
      %v202 = vunpack.c.l.b16 %v154
      %v203 = vunpack.c.l.b16 %v155
      %v204 = vunpack.c.l.b16 %v156
      %v205 = vunpack.c.l.b16 %v157
      %v206 = vunpack.c.l.b16 %v158
      %v207 = vunpack.c.l.b16 %v159
      %v208 = vunpack.c.l.b16 %v160
      %v209 = vunpack.c.l.b16 %v161
      %v210 = vunpack.c.l.b16 %v162
      %v211 = vunpack.c.l.b16 %v163
      %v212 = vpack.c.b16 %v197, %v196
      %v213 = vpack.c.b16 %v199, %v198
      %v214 = vpack.c.b16 %v201, %v200
      %v215 = vpack.c.b16 %v203, %v202
      %v216 = vpack.c.b16 %v205, %v204
      %v217 = vpack.c.b16 %v207, %v206
      %v218 = vpack.c.b16 %v209, %v208
      %v219 = vpack.c.b16 %v211, %v210
      %v244 = vunpack.c.l.b16 %v164
      %v245 = vunpack.c.l.b16 %v165
      %v246 = vunpack.c.l.b16 %v166
      %v247 = vunpack.c.l.b16 %v167
      %v248 = vunpack.c.l.b16 %v168
      %v249 = vunpack.c.l.b16 %v169
      %v250 = vunpack.c.l.b16 %v170
      %v251 = vunpack.c.l.b16 %v171
      %v252 = vunpack.c.l.b16 %v172
      %v253 = vunpack.c.l.b16 %v173
      %v254 = vunpack.c.l.b16 %v174
      %v255 = vunpack.c.l.b16 %v175
      %v256 = vunpack.c.l.b16 %v176
      %v257 = vunpack.c.l.b16 %v177
      %v258 = vunpack.c.l.b16 %v178
      %v259 = vunpack.c.l.b16 %v179
      %v260 = vpack.c.b16 %v245, %v244
      %v261 = vpack.c.b16 %v247, %v246
      %v262 = vpack.c.b16 %v249, %v248
      %v263 = vpack.c.b16 %v251, %v250
      %v264 = vpack.c.b16 %v253, %v252
      %v265 = vpack.c.b16 %v255, %v254
      %v266 = vpack.c.b16 %v257, %v256
      %v267 = vpack.c.b16 %v259, %v258
      %276 = vmatprep.subr.bf16.mxu0 0
      %277 = vmatpush1.bf16.msra.mxu0 %v260
      %278 = vmatprep.subr.bf16.mxu0 0
      %279 = vmatpush1.bf16.msra.mxu0 %v261
      %280 = vmatprep.subr.bf16.mxu0 0
      %281 = vmatpush1.bf16.msra.mxu0 %v262
      %282 = vmatprep.subr.bf16.mxu0 0
      %283 = vmatpush1.bf16.msra.mxu0 %v263
      %284 = vmatprep.subr.bf16.mxu0 0
      %285 = vmatpush1.bf16.msra.mxu0 %v264
      %286 = vmatprep.subr.bf16.mxu0 0
      %287 = vmatpush1.bf16.msra.mxu0 %v265
      %288 = vmatprep.subr.bf16.mxu0 0
      %289 = vmatpush1.bf16.msra.mxu0 %v266
      %290 = vmatprep.subr.bf16.mxu0 0
      %291 = vmatpush1.bf16.msra.mxu0 %v267
      %292 = vmatprep.subr.bf16.mxu0 0
      %293 = vmatpush1.bf16.msra.mxu0 0
      %294 = vmatprep.subr.bf16.mxu0 0
      %295 = vmatpush1.bf16.msra.mxu0 0
      %296 = vmatprep.subr.bf16.mxu0 0
      %297 = vmatpush1.bf16.msra.mxu0 0
      %298 = vmatprep.subr.bf16.mxu0 0
      %299 = vmatpush1.bf16.msra.mxu0 0
      %300 = vmatprep.subr.bf16.mxu0 0
      %301 = vmatpush1.bf16.msra.mxu0 0
      %302 = vmatprep.subr.bf16.mxu0 0
      %303 = vmatpush1.bf16.msra.mxu0 0
      %304 = vmatprep.subr.bf16.mxu0 0
      %305 = vmatpush1.bf16.msra.mxu0 0
      %306 = vmatprep.subr.bf16.mxu0 0
      %307 = vmatpush1.bf16.msra.mxu0 0
      %308 = vmatprep.mubr.bf16.mxu0 0
      %309 = vmatmul.mubr.bf16.gmra.mrb[0].mxu0 %v212
      %v310 = vpop.f32.mrb[0].mxu0
      %v311 = vadd.f32 0.0, %v310
      %v312 = vpop.f32.mrb[0].mxu0
      %v313 = vpop.f32.mrb[0].mxu0
      %v314 = vadd.f32 0.0, %v313
      %v315 = vpop.f32.mrb[0].mxu0
      %316 = vmatprep.mubr.bf16.mxu0 0
      %317 = vmatmul.mubr.bf16.gmra.mrb[0].mxu0 %v213
      %v318 = vpop.f32.mrb[0].mxu0
      %v319 = vadd.f32 0.0, %v318
      %v320 = vpop.f32.mrb[0].mxu0
      %v321 = vpop.f32.mrb[0].mxu0
      %v322 = vadd.f32 0.0, %v321
      %v323 = vpop.f32.mrb[0].mxu0
      %324 = vmatprep.mubr.bf16.mxu0 0
      %325 = vmatmul.mubr.bf16.gmra.mrb[0].mxu0 %v214
      %v326 = vpop.f32.mrb[0].mxu0
      %v327 = vadd.f32 0.0, %v326
      %v328 = vpop.f32.mrb[0].mxu0
      %v329 = vpop.f32.mrb[0].mxu0
      %v330 = vadd.f32 0.0, %v329
      %v331 = vpop.f32.mrb[0].mxu0
      %332 = vmatprep.mubr.bf16.mxu0 0
      %333 = vmatmul.mubr.bf16.gmra.mrb[0].mxu0 %v215
      %v334 = vpop.f32.mrb[0].mxu0
      %v335 = vadd.f32 0.0, %v334
      %v336 = vpop.f32.mrb[0].mxu0
      %v337 = vpop.f32.mrb[0].mxu0
      %v338 = vadd.f32 0.0, %v337
      %v339 = vpop.f32.mrb[0].mxu0
      %340 = vmatprep.mubr.bf16.mxu0 0
      %341 = vmatmul.mubr.bf16.gmra.mrb[0].mxu0 %v216
      %v342 = vpop.f32.mrb[0].mxu0
      %v343 = vadd.f32 0.0, %v342
      %v344 = vpop.f32.mrb[0].mxu0
      %v345 = vpop.f32.mrb[0].mxu0
      %v346 = vadd.f32 0.0, %v345
      %v347 = vpop.f32.mrb[0].mxu0
      %348 = vmatprep.mubr.bf16.mxu0 0
      %349 = vmatmul.mubr.bf16.gmra.mrb[0].mxu0 %v217
      %v350 = vpop.f32.mrb[0].mxu0
      %v351 = vadd.f32 0.0, %v350
      %v352 = vpop.f32.mrb[0].mxu0
      %v353 = vpop.f32.mrb[0].mxu0
      %v354 = vadd.f32 0.0, %v353
      %v355 = vpop.f32.mrb[0].mxu0
      %356 = vmatprep.mubr.bf16.mxu0 0
      %357 = vmatmul.mubr.bf16.gmra.mrb[0].mxu0 %v218
      %v358 = vpop.f32.mrb[0].mxu0
      %v359 = vadd.f32 0.0, %v358
      %v360 = vpop.f32.mrb[0].mxu0
      %v361 = vpop.f32.mrb[0].mxu0
      %v362 = vadd.f32 0.0, %v361
      %v363 = vpop.f32.mrb[0].mxu0
      %364 = vmatprep.mubr.bf16.mxu0 0
      %365 = vmatmul.mubr.bf16.gmra.mrb[0].mxu0 %v219
      %v366 = vpop.f32.mrb[0].mxu0
      %v367 = vadd.f32 0.0, %v366
      %v368 = vpop.f32.mrb[0].mxu0
      %v369 = vpop.f32.mrb[0].mxu0
      %v370 = vadd.f32 0.0, %v369
      %v371 = vpop.f32.mrb[0].mxu0
      %372 = vdwg.mxu0
      %vm373 = vcmp.gt.f32.partialorder %v311, 0.0
      %vm374 = vcmp.gt.f32.partialorder %v314, 0.0
      %vm375 = vcmp.gt.f32.partialorder %v319, 0.0
      %vm376 = vcmp.gt.f32.partialorder %v322, 0.0
      %vm377 = vcmp.gt.f32.partialorder %v327, 0.0
      %vm378 = vcmp.gt.f32.partialorder %v330, 0.0
      %vm379 = vcmp.gt.f32.partialorder %v335, 0.0
      %vm380 = vcmp.gt.f32.partialorder %v338, 0.0
      %vm381 = vcmp.gt.f32.partialorder %v343, 0.0
      %vm382 = vcmp.gt.f32.partialorder %v346, 0.0
      %vm383 = vcmp.gt.f32.partialorder %v351, 0.0
      %vm384 = vcmp.gt.f32.partialorder %v354, 0.0
      %vm385 = vcmp.gt.f32.partialorder %v359, 0.0
      %vm386 = vcmp.gt.f32.partialorder %v362, 0.0
      %vm387 = vcmp.gt.f32.partialorder %v367, 0.0
      %vm388 = vcmp.gt.f32.partialorder %v370, 0.0
      %v389 = vmul.f32 %v311, 0.2
      %v390 = vmul.f32 %v314, 0.2
      %v391 = vmul.f32 %v319, 0.2
      %v392 = vmul.f32 %v322, 0.2
      %v393 = vmul.f32 %v327, 0.2
      %v394 = vmul.f32 %v330, 0.2
      %v395 = vmul.f32 %v335, 0.2
      %v396 = vmul.f32 %v338, 0.2
      %v397 = vmul.f32 %v343, 0.2
      %v398 = vmul.f32 %v346, 0.2
      %v399 = vmul.f32 %v351, 0.2
      %v400 = vmul.f32 %v354, 0.2
      %v401 = vmul.f32 %v359, 0.2
      %v402 = vmul.f32 %v362, 0.2
      %v403 = vmul.f32 %v367, 0.2
      %v404 = vmul.f32 %v370, 0.2
      %v405 = vsel %vm373, %v311, %v389
      %v406 = vsel %vm374, %v314, %v390
      %v407 = vsel %vm375, %v319, %v391
      %v408 = vsel %vm376, %v322, %v392
      %v409 = vsel %vm377, %v327, %v393
      %v410 = vsel %vm378, %v330, %v394
      %v411 = vsel %vm379, %v335, %v395
      %v412 = vsel %vm380, %v338, %v396
      %v413 = vsel %vm381, %v343, %v397
      %v414 = vsel %vm382, %v346, %v398
      %v415 = vsel %vm383, %v351, %v399
      %v416 = vsel %vm384, %v354, %v400
      %v417 = vsel %vm385, %v359, %v401
      %v418 = vsel %vm386, %v362, %v402
      %v419 = vsel %vm387, %v367, %v403
      %v420 = vsel %vm388, %v370, %v404
      %v421 = vpack.c.bf16 %v406, %v405
      %v422 = vpack.c.bf16 %v408, %v407
      %v423 = vpack.c.bf16 %v410, %v409
      %v424 = vpack.c.bf16 %v412, %v411
      %v425 = vpack.c.bf16 %v414, %v413
      %v426 = vpack.c.bf16 %v416, %v415
      %v427 = vpack.c.bf16 %v418, %v417
      %v428 = vpack.c.bf16 %v420, %v419
      %v437 = vunpack.c.l.b16 %v421
      %v438 = vunpack.c.h.b16 %v421
      %v439 = vunpack.c.l.b16 %v422
      %v440 = vunpack.c.h.b16 %v422
      %v441 = vunpack.c.l.b16 %v423
      %v442 = vunpack.c.h.b16 %v423
      %v443 = vunpack.c.l.b16 %v424
      %v444 = vunpack.c.h.b16 %v424
      %v445 = vunpack.c.l.b16 %v425
      %v446 = vunpack.c.h.b16 %v425
      %v447 = vunpack.c.l.b16 %v426
      %v448 = vunpack.c.h.b16 %v426
      %v449 = vunpack.c.l.b16 %v427
      %v450 = vunpack.c.h.b16 %v427
      %v451 = vunpack.c.l.b16 %v428
      %v452 = vunpack.c.h.b16 %v428
      %v453 = vpack.c.b16 %v437, %v437
      %v454 = vpack.c.b16 %v438, %v438
      %v455 = vpack.c.b16 %v439, %v439
      %v456 = vpack.c.b16 %v440, %v440
      %v457 = vpack.c.b16 %v441, %v441
      %v458 = vpack.c.b16 %v442, %v442
      %v459 = vpack.c.b16 %v443, %v443
      %v460 = vpack.c.b16 %v444, %v444
      %v461 = vpack.c.b16 %v445, %v445
      %v462 = vpack.c.b16 %v446, %v446
      %v463 = vpack.c.b16 %v447, %v447
      %v464 = vpack.c.b16 %v448, %v448
      %v465 = vpack.c.b16 %v449, %v449
      %v466 = vpack.c.b16 %v450, %v450
      %v467 = vpack.c.b16 %v451, %v451
      %v468 = vpack.c.b16 %v452, %v452
      %485 = vst [vmem:[%s145] sm:$0xf] %v453
      %486 = vst [vmem:[%s145 + $0x4] sm:$0xf] %v454
      %487 = vst [vmem:[%s145 + $0x8] sm:$0xf] %v455
      %488 = vst [vmem:[%s145 + $0xc] sm:$0xf] %v456
      %489 = vst [vmem:[%s145 + $0x10] sm:$0xf] %v457
      %490 = vst [vmem:[%s145 + $0x14] sm:$0xf] %v458
      %491 = vst [vmem:[%s145 + $0x18] sm:$0xf] %v459
      %492 = vst [vmem:[%s145 + $0x1c] sm:$0xf] %v460
      %493 = vst [vmem:[%s145 + $0x20] sm:$0xf] %v461
      %494 = vst [vmem:[%s145 + $0x24] sm:$0xf] %v462
      %495 = vst [vmem:[%s145 + $0x28] sm:$0xf] %v463
      %496 = vst [vmem:[%s145 + $0x2c] sm:$0xf] %v464
      %497 = vst [vmem:[%s145 + $0x30] sm:$0xf] %v465
      %498 = vst [vmem:[%s145 + $0x34] sm:$0xf] %v466
      %499 = vst [vmem:[%s145 + $0x38] sm:$0xf] %v467
      %500 = vst [vmem:[%s145 + $0x3c] sm:$0xf] %v468
      %s501 = smul.u32 16, %s13
      %p502 = scmp.lt.s32.totalorder %s501, 63
      %s503 = scalar_select %p502, %s501, 63
      %s504 = smul.addr %s503, 4
      %s505 = scalar_lea.vmem %s2, %s504
      // Predicated region
      $region29: #{discriminator_forward.5} parent=27 // pred_check
        %p506 = pneg %p78
      $region30: #{discriminator_forward.5} parent=27 // pred_check_branch
        %508 = sbr.rel (%p506) target = $region32
      $region31: #{discriminator_forward.5} parent=27 // pred_region
        %s509 = smul.u32 16, %s13
      $region32: #{discriminator_forward.5} parent=27 // pred_fallthru
        _
    $region28: #{discriminator_forward.5} parent=5 // pred_fallthru
      _
    %p510 = scmp.le.s32.totalorder 2, %s8
    // Predicated region
    $region33: #{discriminator_forward.5} parent=5 // pred_check
      %p511 = pneg %p510
    $region34: #{discriminator_forward.5} parent=5 // pred_check_branch
      %513 = sbr.rel (%p511) target = $region36
    $region35: #{discriminator_forward.5} parent=5 // pred_region
      %s514 = ssub.s32 %s8, 2
      // Predicated region
      $region37: #{discriminator_forward.5} parent=35 // pred_check
        %p515 = pneg %p84
      $region38: #{discriminator_forward.5} parent=35 // pred_check_branch
        %517 = sbr.rel (%p515) target = $region40
      $region39: #{discriminator_forward.5} parent=35 // pred_region
        %s518 = smul.u32 16, %s14
        %p519 = scmp.lt.s32.totalorder %s518, 63
        %s520 = scalar_select %p519, %s518, 63
        %s521 = smul.addr %s520, 4
        %s522 = scalar_lea.vmem %s2, %s521
      $region40: #{discriminator_forward.5} parent=35 // pred_fallthru
        _
    $region36: #{discriminator_forward.5} parent=5 // pred_fallthru
      _
  $region6: #{discriminator_forward.5} parent=0 // loop_footer
    %s12 = sadd.s32 1, %s8
  $region7: #{discriminator_forward.5} parent=0 // loop_footer_branch
    %7 = sbr.rel target = $region3
  $region8: #{discriminator_forward.5} parent=0 // loop_exit
    _

// kernel: discriminator_forward.6
$region0: #{discriminator_forward.6}
  #allocation0 [shape = 'u32[]', space=smem, size = 0x4, offset = 0x4, fixed_abs, tag = 'smem constant byte address 0x4 - core index']
  #allocation1 [shape = 'u32[144,128]{1,0:T(1,128)}', space=vmem, size = 0x12000, scoped, tag = 'internal scratch']
  %s0 = inlined_call_operand.vmem [shape: bf16[128,128], index: 0, kind: input, shape index: {}]
  %s1 = inlined_call_operand.vmem [shape: bf16[128,128], index: 1, kind: input, shape index: {}]
  %s2 = inlined_call_operand.vmem [shape: f32[4,8,128], index: 2, kind: output, shape index: {}]
  %s3 = sld [smem:[#allocation0]]
  $region41: #{discriminator_forward.6} parent=0
    _
  %s5 = ssub.s32 1, %s3
  %s6 = scalar_select 0, %s5, %s3
  loop: start=0, step=1, limit=6
  $region2: #{discriminator_forward.6} parent=0 // loop_pre_header
    _
  $region3: #{discriminator_forward.6} parent=0 // loop_header
    %s8 = sphi 0, %s12
    %p9 = scmp.ge.s32.totalorder %s8, 6
    %s18 = sphi 0, %s20
    %s21 = sphi 0, %s18
    %s22 = sphi 0, %s21
    %s38 = sphi 0, %s22
    %s42 = sphi 0, %s42
    %s44 = sphi 0, %s42
    %s45 = sphi 0, %s44
    %s59 = sphi 0, %s45
    %s65 = sphi 0, %s67
    %s68 = sphi 0, %s65
    %s69 = sphi 0, %s68
    %s85 = sphi 0, %s69
  $region4: #{discriminator_forward.6} parent=0 // loop_header_branch
    %11 = sbr.rel (%p9) target = $region8
  $region5: #{discriminator_forward.6} parent=0 // loop_body
    %s13 = ssub.s32 %s8, 1
    %s14 = ssub.s32 %s8, 2
    %s15 = sadd.s32 %s8, 1
    %s16 = ssub.s32 %s8, %s15
    %p17 = scmp.eq.s32.totalorder %s16, 0
    %s19 = sadd.s32 %s18, 1
    %s20 = scalar_select %p17, %s18, %s19
    %p23 = pneg %p17
    %p24 = scmp.eq.s32.totalorder %s8, 3
    %p25 = por %p23, %p24
    %p26 = scmp.ne.s32.totalorder %s18, %s21
    %p27 = scmp.eq.s32.totalorder %s8, 0
    %p28 = por %p26, %p27
    %p29 = scmp.ne.s32.totalorder %s18, %s21
    %p30 = scmp.eq.s32.totalorder %s13, 3
    %p31 = por %p29, %p30
    %p32 = scmp.ne.s32.totalorder %s21, %s22
    %p33 = scmp.eq.s32.totalorder %s13, 0
    %p34 = por %p32, %p33
    %p35 = scmp.ne.s32.totalorder %s21, %s22
    %p36 = scmp.eq.s32.totalorder %s14, 3
    %p37 = por %p35, %p36
    %p39 = scmp.ne.s32.totalorder %s22, %s38
    %p40 = scmp.eq.s32.totalorder %s14, 0
    %p41 = por %p39, %p40
    %s43 = sadd.s32 %s42, 1
    %p46 = scmp.eq.s32.totalorder %s8, 3
    %p47 = scmp.ne.s32.totalorder %s42, %s44
    %p48 = scmp.eq.s32.totalorder %s8, 0
    %p49 = por %p47, %p48
    %p50 = scmp.ne.s32.totalorder %s42, %s44
    %p51 = scmp.eq.s32.totalorder %s13, 3
    %p52 = por %p50, %p51
    %p53 = scmp.ne.s32.totalorder %s44, %s45
    %p54 = scmp.eq.s32.totalorder %s13, 0
    %p55 = por %p53, %p54
    %p56 = scmp.ne.s32.totalorder %s44, %s45
    %p57 = scmp.eq.s32.totalorder %s14, 3
    %p58 = por %p56, %p57
    %p60 = scmp.ne.s32.totalorder %s45, %s59
    %p61 = scmp.eq.s32.totalorder %s14, 0
    %p62 = por %p60, %p61
    %s63 = ssub.s32 %s8, %s15
    %p64 = scmp.eq.s32.totalorder %s63, 0
    %s66 = sadd.s32 %s65, 1
    %s67 = scalar_select %p64, %s65, %s66
    %p70 = pneg %p64
    %p71 = scmp.eq.s32.totalorder %s8, 3
    %p72 = por %p70, %p71
    %p73 = scmp.ne.s32.totalorder %s65, %s68
    %p74 = scmp.eq.s32.totalorder %s8, 0
    %p75 = por %p73, %p74
    %p76 = scmp.ne.s32.totalorder %s65, %s68
    %p77 = scmp.eq.s32.totalorder %s13, 3
    %p78 = por %p76, %p77
    %p79 = scmp.ne.s32.totalorder %s68, %s69
    %p80 = scmp.eq.s32.totalorder %s13, 0
    %p81 = por %p79, %p80
    %p82 = scmp.ne.s32.totalorder %s68, %s69
    %p83 = scmp.eq.s32.totalorder %s14, 3
    %p84 = por %p82, %p83
    %p86 = scmp.ne.s32.totalorder %s69, %s85
    %p87 = scmp.eq.s32.totalorder %s14, 0
    %p88 = por %p86, %p87
    %p89 = scmp.le.s32.totalorder 1, %s8
    %p90 = scmp.lt.s32.totalorder %s8, 5
    %p91 = pnand %p89, %p90
    %p92 = pneg %p91
    // Predicated region
    $region9: #{discriminator_forward.6} parent=5 // pred_check
      _
    $region10: #{discriminator_forward.6} parent=5 // pred_check_branch
      %94 = sbr.rel (%p91) target = $region12
    $region11: #{discriminator_forward.6} parent=5 // pred_region
      %s95 = ssub.s32 %s8, 1
      // Predicated region
      $region13: #{discriminator_forward.6} parent=11 // pred_check
        %p96 = pneg %p55
      $region14: #{discriminator_forward.6} parent=11 // pred_check_branch
        %98 = sbr.rel (%p96) target = $region16
      $region15: #{discriminator_forward.6} parent=11 // pred_region
        _
      $region16: #{discriminator_forward.6} parent=11 // pred_fallthru
        _
    $region12: #{discriminator_forward.6} parent=5 // pred_fallthru
      _
    %p99 = scmp.lt.s32.totalorder %s8, 4
    // Predicated region
    $region17: #{discriminator_forward.6} parent=5 // pred_check
      %p100 = pneg %p99
    $region18: #{discriminator_forward.6} parent=5 // pred_check_branch
      %102 = sbr.rel (%p100) target = $region20
    $region19: #{discriminator_forward.6} parent=5 // pred_region
      // Predicated region
      $region21: #{discriminator_forward.6} parent=19 // pred_check
        %p103 = pneg %p28
      $region22: #{discriminator_forward.6} parent=19 // pred_check_branch
        %105 = sbr.rel (%p103) target = $region24
      $region23: #{discriminator_forward.6} parent=19 // pred_region
        %s106 = smul.u32 4, %s8
        %p107 = scmp.lt.s32.totalorder %s106, 15
        %s108 = scalar_select %p107, %s106, 15
        %s109 = smul.addr %s108, 4
        %s110 = scalar_lea.vmem %s0, %s109
        %s111 = smul.u32 4, %s8
      $region24: #{discriminator_forward.6} parent=19 // pred_fallthru
        _
    $region20: #{discriminator_forward.6} parent=5 // pred_fallthru
      _
    %p112 = scmp.le.s32.totalorder 1, %s8
    %p113 = scmp.lt.s32.totalorder %s8, 5
    %p114 = pnand %p112, %p113
    %p115 = pneg %p114
    // Predicated region
    $region25: #{discriminator_forward.6} parent=5 // pred_check
      _
    $region26: #{discriminator_forward.6} parent=5 // pred_check_branch
      %117 = sbr.rel (%p114) target = $region28
    $region27: #{discriminator_forward.6} parent=5 // pred_region
      %s118 = ssub.s32 %s8, 1
      %s119 = smul.u32 4, %s13
      %p120 = scmp.lt.s32.totalorder %s119, 15
      %s121 = scalar_select %p120, %s119, 15
      %s122 = smul.addr %s121, 4
      %s123 = scalar_lea.vmem %s0, %s122
      %p124 = pneg %p34
      %p125 = pneg %p31
      %p126 = pneg %p55
      %p127 = pneg %p52
      %p128 = pneg %p81
      %p129 = pneg %p78
      %p130 = scmp.lt.s32.totalorder %s13, 3
      %s131 = scalar_select %p130, %s13, 3
      %s132 = smul.addr %s131, 8
      %s133 = scalar_lea.vmem %s2, %s132
      %s134 = smul.u32 4, %s13
      %p135 = scmp.lt.s32.totalorder %s134, 15
      %s136 = scalar_select %p135, %s134, 15
      %s137 = smul.addr %s136, 4
      %s138 = scalar_lea.vmem %s0, %s137
      %s139 = smul.u32 4, %s13
      %p140 = scmp.lt.s32.totalorder %s13, 3
      %s141 = scalar_select %p140, %s13, 3
      %s142 = smul.addr %s141, 8
      %s143 = scalar_lea.vmem %s2, %s142
      %v145 = vld [vmem:[%s138] sm:$0xf]
      %v146 = vld [vmem:[%s138 + $0x4] sm:$0xf]
      %v147 = vld [vmem:[%s138 + $0x8] sm:$0xf]
      %v148 = vld [vmem:[%s138 + $0xc] sm:$0xf]
      %v149 = vld [vmem:[%s1] sm:$0xf]
      %v150 = vld [vmem:[%s1 + $0x4] sm:$0xf]
      %v151 = vld [vmem:[%s1 + $0x8] sm:$0xf]
      %v152 = vld [vmem:[%s1 + $0xc] sm:$0xf]
      %v153 = vld [vmem:[%s1 + $0x10] sm:$0xf]
      %v154 = vld [vmem:[%s1 + $0x14] sm:$0xf]
      %v155 = vld [vmem:[%s1 + $0x18] sm:$0xf]
      %v156 = vld [vmem:[%s1 + $0x1c] sm:$0xf]
      %v157 = vld [vmem:[%s1 + $0x20] sm:$0xf]
      %v158 = vld [vmem:[%s1 + $0x24] sm:$0xf]
      %v159 = vld [vmem:[%s1 + $0x28] sm:$0xf]
      %v160 = vld [vmem:[%s1 + $0x2c] sm:$0xf]
      %v161 = vld [vmem:[%s1 + $0x30] sm:$0xf]
      %v162 = vld [vmem:[%s1 + $0x34] sm:$0xf]
      %v163 = vld [vmem:[%s1 + $0x38] sm:$0xf]
      %v164 = vld [vmem:[%s1 + $0x3c] sm:$0xf]
      %v169 = vunpack.c.l.b16 %v145
      %v170 = vunpack.c.l.b16 %v146
      %v171 = vunpack.c.l.b16 %v147
      %v172 = vunpack.c.l.b16 %v148
      %v173 = vpack.c.b16 %v170, %v169
      %v174 = vpack.c.b16 %v172, %v171
      %v193 = vunpack.c.l.b16 %v149
      %v194 = vunpack.c.l.b16 %v150
      %v195 = vunpack.c.l.b16 %v151
      %v196 = vunpack.c.l.b16 %v152
      %v197 = vunpack.c.l.b16 %v153
      %v198 = vunpack.c.l.b16 %v154
      %v199 = vunpack.c.l.b16 %v155
      %v200 = vunpack.c.l.b16 %v156
      %v201 = vunpack.c.l.b16 %v157
      %v202 = vunpack.c.l.b16 %v158
      %v203 = vunpack.c.l.b16 %v159
      %v204 = vunpack.c.l.b16 %v160
      %v205 = vunpack.c.l.b16 %v161
      %v206 = vunpack.c.l.b16 %v162
      %v207 = vunpack.c.l.b16 %v163
      %v208 = vunpack.c.l.b16 %v164
      %v209 = vpack.c.b16 %v194, %v193
      %v210 = vpack.c.b16 %v196, %v195
      %v211 = vpack.c.b16 %v198, %v197
      %v212 = vpack.c.b16 %v200, %v199
      %v213 = vpack.c.b16 %v202, %v201
      %v214 = vpack.c.b16 %v204, %v203
      %v215 = vpack.c.b16 %v206, %v205
      %v216 = vpack.c.b16 %v208, %v207
      %225 = vmatprep.subr.bf16.mxu0 0
      %226 = vmatpush1.bf16.msra.mxu0 %v209
      %227 = vmatprep.subr.bf16.mxu0 0
      %228 = vmatpush1.bf16.msra.mxu0 %v210
      %229 = vmatprep.subr.bf16.mxu0 0
      %230 = vmatpush1.bf16.msra.mxu0 %v211
      %231 = vmatprep.subr.bf16.mxu0 0
      %232 = vmatpush1.bf16.msra.mxu0 %v212
      %233 = vmatprep.subr.bf16.mxu0 0
      %234 = vmatpush1.bf16.msra.mxu0 %v213
      %235 = vmatprep.subr.bf16.mxu0 0
      %236 = vmatpush1.bf16.msra.mxu0 %v214
      %237 = vmatprep.subr.bf16.mxu0 0
      %238 = vmatpush1.bf16.msra.mxu0 %v215
      %239 = vmatprep.subr.bf16.mxu0 0
      %240 = vmatpush1.bf16.msra.mxu0 %v216
      %241 = vmatprep.subr.bf16.mxu0 0
      %242 = vmatpush1.bf16.msra.mxu0 0
      %243 = vmatprep.subr.bf16.mxu0 0
      %244 = vmatpush1.bf16.msra.mxu0 0
      %245 = vmatprep.subr.bf16.mxu0 0
      %246 = vmatpush1.bf16.msra.mxu0 0
      %247 = vmatprep.subr.bf16.mxu0 0
      %248 = vmatpush1.bf16.msra.mxu0 0
      %249 = vmatprep.subr.bf16.mxu0 0
      %250 = vmatpush1.bf16.msra.mxu0 0
      %251 = vmatprep.subr.bf16.mxu0 0
      %252 = vmatpush1.bf16.msra.mxu0 0
      %253 = vmatprep.subr.bf16.mxu0 0
      %254 = vmatpush1.bf16.msra.mxu0 0
      %255 = vmatprep.subr.bf16.mxu0 0
      %256 = vmatpush1.bf16.msra.mxu0 0
      %257 = vmatprep.mubr.bf16.mxu0 0
      %258 = vmatmul.mubr.bf16.gmra.mrb[0].mxu0 %v173
      %v259 = vpop.f32.mrb[0].mxu0
      %v260 = vadd.f32 0.0, %v259
      %v261 = vpop.f32.mrb[0].mxu0
      %v262 = vpop.f32.mrb[0].mxu0
      %v263 = vadd.f32 0.0, %v262
      %v264 = vpop.f32.mrb[0].mxu0
      %265 = vmatprep.mubr.bf16.mxu0 0
      %266 = vmatmul.mubr.bf16.gmra.mrb[0].mxu0 %v174
      %v267 = vpop.f32.mrb[0].mxu0
      %v268 = vadd.f32 0.0, %v267
      %v269 = vpop.f32.mrb[0].mxu0
      %v270 = vpop.f32.mrb[0].mxu0
      %v271 = vadd.f32 0.0, %v270
      %v272 = vpop.f32.mrb[0].mxu0
      %273 = vdwg.mxu0
      %v274 = vadd.f32 %v260, %v263
      %v275 = vadd.f32 %v274, %v268
      %v276 = vadd.f32 %v275, %v271
      %v277 = vrot.slane %v276, 4
      %v278 = vadd.f32 %v276, %v277
      %v279 = vrot.slane %v278, 2
      %v280 = vadd.f32 %v278, %v279
      %v281 = vrot.slane %v280, 1
      %v282 = vadd.f32 %v280, %v281
      %v283 = vmul.f32 %v260, %v260
      %v284 = vmul.f32 %v263, %v263
      %v285 = vmul.f32 %v268, %v268
      %v286 = vmul.f32 %v271, %v271
      %v287 = vadd.f32 %v283, %v284
      %v288 = vadd.f32 %v287, %v285
      %v289 = vadd.f32 %v288, %v286
      %v290 = vrot.slane %v289, 4
      %v291 = vadd.f32 %v289, %v290
      %v292 = vrot.slane %v291, 2
      %v293 = vadd.f32 %v291, %v292
      %v294 = vrot.slane %v293, 1
      %v295 = vadd.f32 %v293, %v294
      %vm296 = vcmask 1040384
      %v297 = vsel %vm296, %v282, %v295
      %vm298 = vcmask 1041408
      %v299 = vsel %vm298, %v297, 0.0
      %300 = vst [vmem:[%s143] sm:$0xff] %v299
      %p301 = scmp.lt.s32.totalorder %s13, 3
      %s302 = scalar_select %p301, %s13, 3
      %s303 = smul.addr %s302, 8
      %s304 = scalar_lea.vmem %s2, %s303
      // Predicated region
      $region29: #{discriminator_forward.6} parent=27 // pred_check
        %p305 = pneg %p78
      $region30: #{discriminator_forward.6} parent=27 // pred_check_branch
        %307 = sbr.rel (%p305) target = $region32
      $region31: #{discriminator_forward.6} parent=27 // pred_region
        _
      $region32: #{discriminator_forward.6} parent=27 // pred_fallthru
        _
    $region28: #{discriminator_forward.6} parent=5 // pred_fallthru
      _
    %p308 = scmp.le.s32.totalorder 2, %s8
    // Predicated region
    $region33: #{discriminator_forward.6} parent=5 // pred_check
      %p309 = pneg %p308
    $region34: #{discriminator_forward.6} parent=5 // pred_check_branch
      %311 = sbr.rel (%p309) target = $region36
    $region35: #{discriminator_forward.6} parent=5 // pred_region
      %s312 = ssub.s32 %s8, 2
      // Predicated region
      $region37: #{discriminator_forward.6} parent=35 // pred_check
        %p313 = pneg %p84
      $region38: #{discriminator_forward.6} parent=35 // pred_check_branch
        %315 = sbr.rel (%p313) target = $region40
      $region39: #{discriminator_forward.6} parent=35 // pred_region
        %p316 = scmp.lt.s32.totalorder %s14, 3
        %s317 = scalar_select %p316, %s14, 3
        %s318 = smul.addr %s317, 8
        %s319 = scalar_lea.vmem %s2, %s318
      $region40: #{discriminator_forward.6} parent=35 // pred_fallthru
        _
    $region36: #{discriminator_forward.6} parent=5 // pred_fallthru
      _
  $region6: #{discriminator_forward.6} parent=0 // loop_footer
    %s12 = sadd.s32 1, %s8
  $region7: #{discriminator_forward.6} parent=0 // loop_footer_branch
    %7 = sbr.rel target = $region3
  $region8: #{discriminator_forward.6} parent=0 // loop_exit
    _

// kernel: discriminator_forward.7
$region0: #{discriminator_forward.7}
  #allocation0 [shape = 'u32[]', space=smem, size = 0x4, offset = 0x4, fixed_abs, tag = 'smem constant byte address 0x4 - core index']
  #allocation1 [shape = 'u32[144,128]{1,0:T(1,128)}', space=vmem, size = 0x12000, scoped, tag = 'internal scratch']
  %s0 = inlined_call_operand.vmem [shape: bf16[128,128], index: 0, kind: input, shape index: {}]
  %s1 = inlined_call_operand.vmem [shape: bf16[128,128], index: 1, kind: input, shape index: {}]
  %s2 = inlined_call_operand.vmem [shape: f32[1,128], index: 2, kind: input, shape index: {}]
  %s3 = inlined_call_operand.vmem [shape: f32[1,128], index: 3, kind: input, shape index: {}]
  %s4 = inlined_call_operand.vmem [shape: bf16[128,128], index: 4, kind: output, shape index: {}]
  %s5 = sld [smem:[#allocation0]]
  $region49: #{discriminator_forward.7} parent=0
    _
  %s7 = ssub.s32 1, %s5
  %s8 = scalar_select 0, %s7, %s5
  loop: start=0, step=1, limit=6
  $region2: #{discriminator_forward.7} parent=0 // loop_pre_header
    _
  $region3: #{discriminator_forward.7} parent=0 // loop_header
    %s10 = sphi 0, %s14
    %p11 = scmp.ge.s32.totalorder %s10, 6
    %s20 = sphi 0, %s22
    %s23 = sphi 0, %s20
    %s24 = sphi 0, %s23
    %s40 = sphi 0, %s24
    %s44 = sphi 0, %s44
    %s46 = sphi 0, %s44
    %s47 = sphi 0, %s46
    %s61 = sphi 0, %s47
    %s65 = sphi 0, %s65
    %s67 = sphi 0, %s65
    %s68 = sphi 0, %s67
    %s82 = sphi 0, %s68
    %s86 = sphi 0, %s86
    %s88 = sphi 0, %s86
    %s89 = sphi 0, %s88
    %s103 = sphi 0, %s89
    %s109 = sphi 0, %s111
    %s112 = sphi 0, %s109
    %s113 = sphi 0, %s112
    %s129 = sphi 0, %s113
  $region4: #{discriminator_forward.7} parent=0 // loop_header_branch
    %13 = sbr.rel (%p11) target = $region8
  $region5: #{discriminator_forward.7} parent=0 // loop_body
    %s15 = ssub.s32 %s10, 1
    %s16 = ssub.s32 %s10, 2
    %s17 = sadd.s32 %s10, 1
    %s18 = ssub.s32 %s10, %s17
    %p19 = scmp.eq.s32.totalorder %s18, 0
    %s21 = sadd.s32 %s20, 1
    %s22 = scalar_select %p19, %s20, %s21
    %p25 = pneg %p19
    %p26 = scmp.eq.s32.totalorder %s10, 3
    %p27 = por %p25, %p26
    %p28 = scmp.ne.s32.totalorder %s20, %s23
    %p29 = scmp.eq.s32.totalorder %s10, 0
    %p30 = por %p28, %p29
    %p31 = scmp.ne.s32.totalorder %s20, %s23
    %p32 = scmp.eq.s32.totalorder %s15, 3
    %p33 = por %p31, %p32
    %p34 = scmp.ne.s32.totalorder %s23, %s24
    %p35 = scmp.eq.s32.totalorder %s15, 0
    %p36 = por %p34, %p35
    %p37 = scmp.ne.s32.totalorder %s23, %s24
    %p38 = scmp.eq.s32.totalorder %s16, 3
    %p39 = por %p37, %p38
    %p41 = scmp.ne.s32.totalorder %s24, %s40
    %p42 = scmp.eq.s32.totalorder %s16, 0
    %p43 = por %p41, %p42
    %s45 = sadd.s32 %s44, 1
    %p48 = scmp.eq.s32.totalorder %s10, 3
    %p49 = scmp.ne.s32.totalorder %s44, %s46
    %p50 = scmp.eq.s32.totalorder %s10, 0
    %p51 = por %p49, %p50
    %p52 = scmp.ne.s32.totalorder %s44, %s46
    %p53 = scmp.eq.s32.totalorder %s15, 3
    %p54 = por %p52, %p53
    %p55 = scmp.ne.s32.totalorder %s46, %s47
    %p56 = scmp.eq.s32.totalorder %s15, 0
    %p57 = por %p55, %p56
    %p58 = scmp.ne.s32.totalorder %s46, %s47
    %p59 = scmp.eq.s32.totalorder %s16, 3
    %p60 = por %p58, %p59
    %p62 = scmp.ne.s32.totalorder %s47, %s61
    %p63 = scmp.eq.s32.totalorder %s16, 0
    %p64 = por %p62, %p63
    %s66 = sadd.s32 %s65, 1
    %p69 = scmp.eq.s32.totalorder %s10, 3
    %p70 = scmp.ne.s32.totalorder %s65, %s67
    %p71 = scmp.eq.s32.totalorder %s10, 0
    %p72 = por %p70, %p71
    %p73 = scmp.ne.s32.totalorder %s65, %s67
    %p74 = scmp.eq.s32.totalorder %s15, 3
    %p75 = por %p73, %p74
    %p76 = scmp.ne.s32.totalorder %s67, %s68
    %p77 = scmp.eq.s32.totalorder %s15, 0
    %p78 = por %p76, %p77
    %p79 = scmp.ne.s32.totalorder %s67, %s68
    %p80 = scmp.eq.s32.totalorder %s16, 3
    %p81 = por %p79, %p80
    %p83 = scmp.ne.s32.totalorder %s68, %s82
    %p84 = scmp.eq.s32.totalorder %s16, 0
    %p85 = por %p83, %p84
    %s87 = sadd.s32 %s86, 1
    %p90 = scmp.eq.s32.totalorder %s10, 3
    %p91 = scmp.ne.s32.totalorder %s86, %s88
    %p92 = scmp.eq.s32.totalorder %s10, 0
    %p93 = por %p91, %p92
    %p94 = scmp.ne.s32.totalorder %s86, %s88
    %p95 = scmp.eq.s32.totalorder %s15, 3
    %p96 = por %p94, %p95
    %p97 = scmp.ne.s32.totalorder %s88, %s89
    %p98 = scmp.eq.s32.totalorder %s15, 0
    %p99 = por %p97, %p98
    %p100 = scmp.ne.s32.totalorder %s88, %s89
    %p101 = scmp.eq.s32.totalorder %s16, 3
    %p102 = por %p100, %p101
    %p104 = scmp.ne.s32.totalorder %s89, %s103
    %p105 = scmp.eq.s32.totalorder %s16, 0
    %p106 = por %p104, %p105
    %s107 = ssub.s32 %s10, %s17
    %p108 = scmp.eq.s32.totalorder %s107, 0
    %s110 = sadd.s32 %s109, 1
    %s111 = scalar_select %p108, %s109, %s110
    %p114 = pneg %p108
    %p115 = scmp.eq.s32.totalorder %s10, 3
    %p116 = por %p114, %p115
    %p117 = scmp.ne.s32.totalorder %s109, %s112
    %p118 = scmp.eq.s32.totalorder %s10, 0
    %p119 = por %p117, %p118
    %p120 = scmp.ne.s32.totalorder %s109, %s112
    %p121 = scmp.eq.s32.totalorder %s15, 3
    %p122 = por %p120, %p121
    %p123 = scmp.ne.s32.totalorder %s112, %s113
    %p124 = scmp.eq.s32.totalorder %s15, 0
    %p125 = por %p123, %p124
    %p126 = scmp.ne.s32.totalorder %s112, %s113
    %p127 = scmp.eq.s32.totalorder %s16, 3
    %p128 = por %p126, %p127
    %p130 = scmp.ne.s32.totalorder %s113, %s129
    %p131 = scmp.eq.s32.totalorder %s16, 0
    %p132 = por %p130, %p131
    %p133 = scmp.le.s32.totalorder 1, %s10
    %p134 = scmp.lt.s32.totalorder %s10, 5
    %p135 = pnand %p133, %p134
    %p136 = pneg %p135
    // Predicated region
    $region9: #{discriminator_forward.7} parent=5 // pred_check
      _
    $region10: #{discriminator_forward.7} parent=5 // pred_check_branch
      %138 = sbr.rel (%p135) target = $region12
    $region11: #{discriminator_forward.7} parent=5 // pred_region
      %s139 = ssub.s32 %s10, 1
      // Predicated region
      $region13: #{discriminator_forward.7} parent=11 // pred_check
        %p140 = pneg %p57
      $region14: #{discriminator_forward.7} parent=11 // pred_check_branch
        %142 = sbr.rel (%p140) target = $region16
      $region15: #{discriminator_forward.7} parent=11 // pred_region
        _
      $region16: #{discriminator_forward.7} parent=11 // pred_fallthru
        _
      // Predicated region
      $region17: #{discriminator_forward.7} parent=11 // pred_check
        %p143 = pneg %p78
      $region18: #{discriminator_forward.7} parent=11 // pred_check_branch
        %145 = sbr.rel (%p143) target = $region20
      $region19: #{discriminator_forward.7} parent=11 // pred_region
        _
      $region20: #{discriminator_forward.7} parent=11 // pred_fallthru
        _
      // Predicated region
      $region21: #{discriminator_forward.7} parent=11 // pred_check
        %p146 = pneg %p99
      $region22: #{discriminator_forward.7} parent=11 // pred_check_branch
        %148 = sbr.rel (%p146) target = $region24
      $region23: #{discriminator_forward.7} parent=11 // pred_region
        _
      $region24: #{discriminator_forward.7} parent=11 // pred_fallthru
        _
    $region12: #{discriminator_forward.7} parent=5 // pred_fallthru
      _
    %p149 = scmp.lt.s32.totalorder %s10, 4
    // Predicated region
    $region25: #{discriminator_forward.7} parent=5 // pred_check
      %p150 = pneg %p149
    $region26: #{discriminator_forward.7} parent=5 // pred_check_branch
      %152 = sbr.rel (%p150) target = $region28
    $region27: #{discriminator_forward.7} parent=5 // pred_region
      // Predicated region
      $region29: #{discriminator_forward.7} parent=27 // pred_check
        %p153 = pneg %p30
      $region30: #{discriminator_forward.7} parent=27 // pred_check_branch
        %155 = sbr.rel (%p153) target = $region32
      $region31: #{discriminator_forward.7} parent=27 // pred_region
        %s156 = smul.u32 4, %s10
        %p157 = scmp.lt.s32.totalorder %s156, 15
        %s158 = scalar_select %p157, %s156, 15
        %s159 = smul.addr %s158, 4
        %s160 = scalar_lea.vmem %s0, %s159
        %s161 = smul.u32 4, %s10
      $region32: #{discriminator_forward.7} parent=27 // pred_fallthru
        _
    $region28: #{discriminator_forward.7} parent=5 // pred_fallthru
      _
    %p162 = scmp.le.s32.totalorder 1, %s10
    %p163 = scmp.lt.s32.totalorder %s10, 5
    %p164 = pnand %p162, %p163
    %p165 = pneg %p164
    // Predicated region
    $region33: #{discriminator_forward.7} parent=5 // pred_check
      _
    $region34: #{discriminator_forward.7} parent=5 // pred_check_branch
      %167 = sbr.rel (%p164) target = $region36
    $region35: #{discriminator_forward.7} parent=5 // pred_region
      %s168 = ssub.s32 %s10, 1
      %s169 = smul.u32 4, %s15
      %p170 = scmp.lt.s32.totalorder %s169, 15
      %s171 = scalar_select %p170, %s169, 15
      %s172 = smul.addr %s171, 4
      %s173 = scalar_lea.vmem %s0, %s172
      %p174 = pneg %p36
      %p175 = pneg %p33
      %p176 = pneg %p57
      %p177 = pneg %p54
      %p178 = pneg %p78
      %p179 = pneg %p75
      %p180 = pneg %p99
      %p181 = pneg %p96
      %p182 = pneg %p125
      %p183 = pneg %p122
      %s184 = smul.u32 4, %s15
      %p185 = scmp.lt.s32.totalorder %s184, 15
      %s186 = scalar_select %p185, %s184, 15
      %s187 = smul.addr %s186, 4
      %s188 = scalar_lea.vmem %s4, %s187
      %s189 = smul.u32 4, %s15
      %p190 = scmp.lt.s32.totalorder %s189, 15
      %s191 = scalar_select %p190, %s189, 15
      %s192 = smul.addr %s191, 4
      %s193 = scalar_lea.vmem %s0, %s192
      %s194 = smul.u32 4, %s15
      %s195 = smul.u32 4, %s15
      %p196 = scmp.lt.s32.totalorder %s195, 15
      %s197 = scalar_select %p196, %s195, 15
      %s198 = smul.addr %s197, 4
      %s199 = scalar_lea.vmem %s4, %s198
      %s200 = smul.u32 4, %s15
      %v202 = vld [vmem:[%s193] sm:$0xf]
      %v203 = vld [vmem:[%s193 + $0x4] sm:$0xf]
      %v204 = vld [vmem:[%s193 + $0x8] sm:$0xf]
      %v205 = vld [vmem:[%s193 + $0xc] sm:$0xf]
      %v206 = vld [vmem:[%s1] sm:$0xf]
      %v207 = vld [vmem:[%s1 + $0x4] sm:$0xf]
      %v208 = vld [vmem:[%s1 + $0x8] sm:$0xf]
      %v209 = vld [vmem:[%s1 + $0xc] sm:$0xf]
      %v210 = vld [vmem:[%s1 + $0x10] sm:$0xf]
      %v211 = vld [vmem:[%s1 + $0x14] sm:$0xf]
      %v212 = vld [vmem:[%s1 + $0x18] sm:$0xf]
      %v213 = vld [vmem:[%s1 + $0x1c] sm:$0xf]
      %v214 = vld [vmem:[%s1 + $0x20] sm:$0xf]
      %v215 = vld [vmem:[%s1 + $0x24] sm:$0xf]
      %v216 = vld [vmem:[%s1 + $0x28] sm:$0xf]
      %v217 = vld [vmem:[%s1 + $0x2c] sm:$0xf]
      %v218 = vld [vmem:[%s1 + $0x30] sm:$0xf]
      %v219 = vld [vmem:[%s1 + $0x34] sm:$0xf]
      %v220 = vld [vmem:[%s1 + $0x38] sm:$0xf]
      %v221 = vld [vmem:[%s1 + $0x3c] sm:$0xf]
      %v226 = vunpack.c.l.b16 %v202
      %v227 = vunpack.c.l.b16 %v203
      %v228 = vunpack.c.l.b16 %v204
      %v229 = vunpack.c.l.b16 %v205
      %v230 = vpack.c.b16 %v227, %v226
      %v231 = vpack.c.b16 %v229, %v228
      %v250 = vunpack.c.l.b16 %v206
      %v251 = vunpack.c.l.b16 %v207
      %v252 = vunpack.c.l.b16 %v208
      %v253 = vunpack.c.l.b16 %v209
      %v254 = vunpack.c.l.b16 %v210
      %v255 = vunpack.c.l.b16 %v211
      %v256 = vunpack.c.l.b16 %v212
      %v257 = vunpack.c.l.b16 %v213
      %v258 = vunpack.c.l.b16 %v214
      %v259 = vunpack.c.l.b16 %v215
      %v260 = vunpack.c.l.b16 %v216
      %v261 = vunpack.c.l.b16 %v217
      %v262 = vunpack.c.l.b16 %v218
      %v263 = vunpack.c.l.b16 %v219
      %v264 = vunpack.c.l.b16 %v220
      %v265 = vunpack.c.l.b16 %v221
      %v266 = vpack.c.b16 %v251, %v250
      %v267 = vpack.c.b16 %v253, %v252
      %v268 = vpack.c.b16 %v255, %v254
      %v269 = vpack.c.b16 %v257, %v256
      %v270 = vpack.c.b16 %v259, %v258
      %v271 = vpack.c.b16 %v261, %v260
      %v272 = vpack.c.b16 %v263, %v262
      %v273 = vpack.c.b16 %v265, %v264
      %282 = vmatprep.subr.bf16.mxu0 0
      %283 = vmatpush1.bf16.msra.mxu0 %v266
      %284 = vmatprep.subr.bf16.mxu0 0
      %285 = vmatpush1.bf16.msra.mxu0 %v267
      %286 = vmatprep.subr.bf16.mxu0 0
      %287 = vmatpush1.bf16.msra.mxu0 %v268
      %288 = vmatprep.subr.bf16.mxu0 0
      %289 = vmatpush1.bf16.msra.mxu0 %v269
      %290 = vmatprep.subr.bf16.mxu0 0
      %291 = vmatpush1.bf16.msra.mxu0 %v270
      %292 = vmatprep.subr.bf16.mxu0 0
      %293 = vmatpush1.bf16.msra.mxu0 %v271
      %294 = vmatprep.subr.bf16.mxu0 0
      %295 = vmatpush1.bf16.msra.mxu0 %v272
      %296 = vmatprep.subr.bf16.mxu0 0
      %297 = vmatpush1.bf16.msra.mxu0 %v273
      %298 = vmatprep.subr.bf16.mxu0 0
      %299 = vmatpush1.bf16.msra.mxu0 0
      %300 = vmatprep.subr.bf16.mxu0 0
      %301 = vmatpush1.bf16.msra.mxu0 0
      %302 = vmatprep.subr.bf16.mxu0 0
      %303 = vmatpush1.bf16.msra.mxu0 0
      %304 = vmatprep.subr.bf16.mxu0 0
      %305 = vmatpush1.bf16.msra.mxu0 0
      %306 = vmatprep.subr.bf16.mxu0 0
      %307 = vmatpush1.bf16.msra.mxu0 0
      %308 = vmatprep.subr.bf16.mxu0 0
      %309 = vmatpush1.bf16.msra.mxu0 0
      %310 = vmatprep.subr.bf16.mxu0 0
      %311 = vmatpush1.bf16.msra.mxu0 0
      %312 = vmatprep.subr.bf16.mxu0 0
      %313 = vmatpush1.bf16.msra.mxu0 0
      %314 = vmatprep.mubr.bf16.mxu0 0
      %315 = vmatmul.mubr.bf16.gmra.mrb[0].mxu0 %v230
      %v316 = vpop.f32.mrb[0].mxu0
      %v317 = vadd.f32 0.0, %v316
      %v318 = vpop.f32.mrb[0].mxu0
      %v319 = vpop.f32.mrb[0].mxu0
      %v320 = vadd.f32 0.0, %v319
      %v321 = vpop.f32.mrb[0].mxu0
      %322 = vmatprep.mubr.bf16.mxu0 0
      %323 = vmatmul.mubr.bf16.gmra.mrb[0].mxu0 %v231
      %v324 = vpop.f32.mrb[0].mxu0
      %v325 = vadd.f32 0.0, %v324
      %v326 = vpop.f32.mrb[0].mxu0
      %v327 = vpop.f32.mrb[0].mxu0
      %v328 = vadd.f32 0.0, %v327
      %v329 = vpop.f32.mrb[0].mxu0
      %330 = vdwg.mxu0
      %v331 = vld [vmem:[%s2] sm:$0x1]
      %v333 = vlaneseq
      %v334 = vshrl.u32 %v333, 7
      %v335 = vsub.s32 0, %v334
      %v336 = vrot.slane %v331, %v335
      %v338 = vmul.f32 %v317, %v336
      %v339 = vmul.f32 %v320, %v336
      %v340 = vmul.f32 %v325, %v336
      %v341 = vmul.f32 %v328, %v336
      %v342 = vld [vmem:[%s3] sm:$0x1]
      %v344 = vlaneseq
      %v345 = vshrl.u32 %v344, 7
      %v346 = vsub.s32 0, %v345
      %v347 = vrot.slane %v342, %v346
      %v349 = vadd.f32 %v338, %v347
      %v350 = vadd.f32 %v339, %v347
      %v351 = vadd.f32 %v340, %v347
      %v352 = vadd.f32 %v341, %v347
      %vm353 = vcmp.gt.f32.partialorder %v349, 0.0
      %vm354 = vcmp.gt.f32.partialorder %v350, 0.0
      %vm355 = vcmp.gt.f32.partialorder %v351, 0.0
      %vm356 = vcmp.gt.f32.partialorder %v352, 0.0
      %v357 = vmul.f32 %v349, 0.2
      %v358 = vmul.f32 %v350, 0.2
      %v359 = vmul.f32 %v351, 0.2
      %v360 = vmul.f32 %v352, 0.2
      %v361 = vsel %vm353, %v349, %v357
      %v362 = vsel %vm354, %v350, %v358
      %v363 = vsel %vm355, %v351, %v359
      %v364 = vsel %vm356, %v352, %v360
      %v365 = vpack.c.bf16 %v362, %v361
      %v366 = vpack.c.bf16 %v364, %v363
      %v369 = vunpack.c.l.b16 %v365
      %v370 = vunpack.c.h.b16 %v365
      %v371 = vunpack.c.l.b16 %v366
      %v372 = vunpack.c.h.b16 %v366
      %v373 = vpack.c.b16 %v369, %v369
      %v374 = vpack.c.b16 %v370, %v370
      %v375 = vpack.c.b16 %v371, %v371
      %v376 = vpack.c.b16 %v372, %v372
      %381 = vst [vmem:[%s199] sm:$0xf] %v373
      %382 = vst [vmem:[%s199 + $0x4] sm:$0xf] %v374
      %383 = vst [vmem:[%s199 + $0x8] sm:$0xf] %v375
      %384 = vst [vmem:[%s199 + $0xc] sm:$0xf] %v376
      %s385 = smul.u32 4, %s15
      %p386 = scmp.lt.s32.totalorder %s385, 15
      %s387 = scalar_select %p386, %s385, 15
      %s388 = smul.addr %s387, 4
      %s389 = scalar_lea.vmem %s4, %s388
      // Predicated region
      $region37: #{discriminator_forward.7} parent=35 // pred_check
        %p390 = pneg %p122
      $region38: #{discriminator_forward.7} parent=35 // pred_check_branch
        %392 = sbr.rel (%p390) target = $region40
      $region39: #{discriminator_forward.7} parent=35 // pred_region
        %s393 = smul.u32 4, %s15
      $region40: #{discriminator_forward.7} parent=35 // pred_fallthru
        _
    $region36: #{discriminator_forward.7} parent=5 // pred_fallthru
      _
    %p394 = scmp.le.s32.totalorder 2, %s10
    // Predicated region
    $region41: #{discriminator_forward.7} parent=5 // pred_check
      %p395 = pneg %p394
    $region42: #{discriminator_forward.7} parent=5 // pred_check_branch
      %397 = sbr.rel (%p395) target = $region44
    $region43: #{discriminator_forward.7} parent=5 // pred_region
      %s398 = ssub.s32 %s10, 2
      // Predicated region
      $region45: #{discriminator_forward.7} parent=43 // pred_check
        %p399 = pneg %p128
      $region46: #{discriminator_forward.7} parent=43 // pred_check_branch
        %401 = sbr.rel (%p399) target = $region48
      $region47: #{discriminator_forward.7} parent=43 // pred_region
        %s402 = smul.u32 4, %s16
        %p403 = scmp.lt.s32.totalorder %s402, 15
        %s404 = scalar_select %p403, %s402, 15
        %s405 = smul.addr %s404, 4
        %s406 = scalar_lea.vmem %s4, %s405
      $region48: #{discriminator_forward.7} parent=43 // pred_fallthru
        _
    $region44: #{discriminator_forward.7} parent=5 // pred_fallthru
      _
  $region6: #{discriminator_forward.7} parent=0 // loop_footer
    %s14 = sadd.s32 1, %s10
  $region7: #{discriminator_forward.7} parent=0 // loop_footer_branch
    %9 = sbr.rel target = $region3
  $region8: #{discriminator_forward.7} parent=0 // loop_exit
    _

// kernel: discriminator_forward.8
$region0: #{discriminator_forward.8}
  #allocation0 [shape = 'u32[]', space=smem, size = 0x4, offset = 0x4, fixed_abs, tag = 'smem constant byte address 0x4 - core index']
  #allocation1 [shape = 'u32[144,128]{1,0:T(1,128)}', space=vmem, size = 0x12000, scoped, tag = 'internal scratch']
  %s0 = inlined_call_operand.vmem [shape: bf16[32,256], index: 0, kind: input, shape index: {}]
  %s1 = inlined_call_operand.vmem [shape: bf16[256,128], index: 1, kind: input, shape index: {}]
  %s2 = inlined_call_operand.vmem [shape: f32[4,8,128], index: 2, kind: output, shape index: {}]
  %s3 = sld [smem:[#allocation0]]
  $region41: #{discriminator_forward.8} parent=0
    _
  %s5 = ssub.s32 1, %s3
  %s6 = scalar_select 0, %s5, %s3
  loop: start=0, step=1, limit=6
  $region2: #{discriminator_forward.8} parent=0 // loop_pre_header
    _
  $region3: #{discriminator_forward.8} parent=0 // loop_header
    %s8 = sphi 0, %s12
    %p9 = scmp.ge.s32.totalorder %s8, 6
    %s18 = sphi 0, %s20
    %s21 = sphi 0, %s18
    %s22 = sphi 0, %s21
    %s38 = sphi 0, %s22
    %s42 = sphi 0, %s42
    %s44 = sphi 0, %s42
    %s45 = sphi 0, %s44
    %s59 = sphi 0, %s45
    %s65 = sphi 0, %s67
    %s68 = sphi 0, %s65
    %s69 = sphi 0, %s68
    %s85 = sphi 0, %s69
  $region4: #{discriminator_forward.8} parent=0 // loop_header_branch
    %11 = sbr.rel (%p9) target = $region8
  $region5: #{discriminator_forward.8} parent=0 // loop_body
    %s13 = ssub.s32 %s8, 1
    %s14 = ssub.s32 %s8, 2
    %s15 = sadd.s32 %s8, 1
    %s16 = ssub.s32 %s8, %s15
    %p17 = scmp.eq.s32.totalorder %s16, 0
    %s19 = sadd.s32 %s18, 1
    %s20 = scalar_select %p17, %s18, %s19
    %p23 = pneg %p17
    %p24 = scmp.eq.s32.totalorder %s8, 3
    %p25 = por %p23, %p24
    %p26 = scmp.ne.s32.totalorder %s18, %s21
    %p27 = scmp.eq.s32.totalorder %s8, 0
    %p28 = por %p26, %p27
    %p29 = scmp.ne.s32.totalorder %s18, %s21
    %p30 = scmp.eq.s32.totalorder %s13, 3
    %p31 = por %p29, %p30
    %p32 = scmp.ne.s32.totalorder %s21, %s22
    %p33 = scmp.eq.s32.totalorder %s13, 0
    %p34 = por %p32, %p33
    %p35 = scmp.ne.s32.totalorder %s21, %s22
    %p36 = scmp.eq.s32.totalorder %s14, 3
    %p37 = por %p35, %p36
    %p39 = scmp.ne.s32.totalorder %s22, %s38
    %p40 = scmp.eq.s32.totalorder %s14, 0
    %p41 = por %p39, %p40
    %s43 = sadd.s32 %s42, 1
    %p46 = scmp.eq.s32.totalorder %s8, 3
    %p47 = scmp.ne.s32.totalorder %s42, %s44
    %p48 = scmp.eq.s32.totalorder %s8, 0
    %p49 = por %p47, %p48
    %p50 = scmp.ne.s32.totalorder %s42, %s44
    %p51 = scmp.eq.s32.totalorder %s13, 3
    %p52 = por %p50, %p51
    %p53 = scmp.ne.s32.totalorder %s44, %s45
    %p54 = scmp.eq.s32.totalorder %s13, 0
    %p55 = por %p53, %p54
    %p56 = scmp.ne.s32.totalorder %s44, %s45
    %p57 = scmp.eq.s32.totalorder %s14, 3
    %p58 = por %p56, %p57
    %p60 = scmp.ne.s32.totalorder %s45, %s59
    %p61 = scmp.eq.s32.totalorder %s14, 0
    %p62 = por %p60, %p61
    %s63 = ssub.s32 %s8, %s15
    %p64 = scmp.eq.s32.totalorder %s63, 0
    %s66 = sadd.s32 %s65, 1
    %s67 = scalar_select %p64, %s65, %s66
    %p70 = pneg %p64
    %p71 = scmp.eq.s32.totalorder %s8, 3
    %p72 = por %p70, %p71
    %p73 = scmp.ne.s32.totalorder %s65, %s68
    %p74 = scmp.eq.s32.totalorder %s8, 0
    %p75 = por %p73, %p74
    %p76 = scmp.ne.s32.totalorder %s65, %s68
    %p77 = scmp.eq.s32.totalorder %s13, 3
    %p78 = por %p76, %p77
    %p79 = scmp.ne.s32.totalorder %s68, %s69
    %p80 = scmp.eq.s32.totalorder %s13, 0
    %p81 = por %p79, %p80
    %p82 = scmp.ne.s32.totalorder %s68, %s69
    %p83 = scmp.eq.s32.totalorder %s14, 3
    %p84 = por %p82, %p83
    %p86 = scmp.ne.s32.totalorder %s69, %s85
    %p87 = scmp.eq.s32.totalorder %s14, 0
    %p88 = por %p86, %p87
    %p89 = scmp.le.s32.totalorder 1, %s8
    %p90 = scmp.lt.s32.totalorder %s8, 5
    %p91 = pnand %p89, %p90
    %p92 = pneg %p91
    // Predicated region
    $region9: #{discriminator_forward.8} parent=5 // pred_check
      _
    $region10: #{discriminator_forward.8} parent=5 // pred_check_branch
      %94 = sbr.rel (%p91) target = $region12
    $region11: #{discriminator_forward.8} parent=5 // pred_region
      %s95 = ssub.s32 %s8, 1
      // Predicated region
      $region13: #{discriminator_forward.8} parent=11 // pred_check
        %p96 = pneg %p55
      $region14: #{discriminator_forward.8} parent=11 // pred_check_branch
        %98 = sbr.rel (%p96) target = $region16
      $region15: #{discriminator_forward.8} parent=11 // pred_region
        _
      $region16: #{discriminator_forward.8} parent=11 // pred_fallthru
        _
    $region12: #{discriminator_forward.8} parent=5 // pred_fallthru
      _
    %p99 = scmp.lt.s32.totalorder %s8, 4
    // Predicated region
    $region17: #{discriminator_forward.8} parent=5 // pred_check
      %p100 = pneg %p99
    $region18: #{discriminator_forward.8} parent=5 // pred_check_branch
      %102 = sbr.rel (%p100) target = $region20
    $region19: #{discriminator_forward.8} parent=5 // pred_region
      // Predicated region
      $region21: #{discriminator_forward.8} parent=19 // pred_check
        %p103 = pneg %p28
      $region22: #{discriminator_forward.8} parent=19 // pred_check_branch
        %105 = sbr.rel (%p103) target = $region24
      $region23: #{discriminator_forward.8} parent=19 // pred_region
        %p106 = scmp.lt.s32.totalorder %s8, 3
        %s107 = scalar_select %p106, %s8, 3
        %s108 = smul.addr %s107, 2
        %s109 = smul.addr %s108, 4
        %s110 = scalar_lea.vmem %s0, %s109
      $region24: #{discriminator_forward.8} parent=19 // pred_fallthru
        _
    $region20: #{discriminator_forward.8} parent=5 // pred_fallthru
      _
    %p111 = scmp.le.s32.totalorder 1, %s8
    %p112 = scmp.lt.s32.totalorder %s8, 5
    %p113 = pnand %p111, %p112
    %p114 = pneg %p113
    // Predicated region
    $region25: #{discriminator_forward.8} parent=5 // pred_check
      _
    $region26: #{discriminator_forward.8} parent=5 // pred_check_branch
      %116 = sbr.rel (%p113) target = $region28
    $region27: #{discriminator_forward.8} parent=5 // pred_region
      %s117 = ssub.s32 %s8, 1
      %p118 = scmp.lt.s32.totalorder %s13, 3
      %s119 = scalar_select %p118, %s13, 3
      %s120 = smul.addr %s119, 2
      %s121 = smul.addr %s120, 4
      %s122 = scalar_lea.vmem %s0, %s121
      %p123 = pneg %p34
      %p124 = pneg %p31
      %p125 = pneg %p55
      %p126 = pneg %p52
      %p127 = pneg %p81
      %p128 = pneg %p78
      %p129 = scmp.lt.s32.totalorder %s13, 3
      %s130 = scalar_select %p129, %s13, 3
      %s131 = smul.addr %s130, 8
      %s132 = scalar_lea.vmem %s2, %s131
      %p133 = scmp.lt.s32.totalorder %s13, 3
      %s134 = scalar_select %p133, %s13, 3
      %s135 = smul.addr %s134, 2
      %s136 = smul.addr %s135, 4
      %s137 = scalar_lea.vmem %s0, %s136
      %p138 = scmp.lt.s32.totalorder %s13, 3
      %s139 = scalar_select %p138, %s13, 3
      %s140 = smul.addr %s139, 8
      %s141 = scalar_lea.vmem %s2, %s140
      %v143 = vld [vmem:[%s137] sm:$0xff]
      %v144 = vld [vmem:[%s1] sm:$0xf]
      %v145 = vld [vmem:[%s1 + $0x4] sm:$0xf]
      %v146 = vld [vmem:[%s1 + $0x8] sm:$0xf]
      %v147 = vld [vmem:[%s1 + $0xc] sm:$0xf]
      %v148 = vld [vmem:[%s1 + $0x10] sm:$0xf]
      %v149 = vld [vmem:[%s1 + $0x14] sm:$0xf]
      %v150 = vld [vmem:[%s1 + $0x18] sm:$0xf]
      %v151 = vld [vmem:[%s1 + $0x1c] sm:$0xf]
      %v152 = vld [vmem:[%s1 + $0x20] sm:$0xf]
      %v153 = vld [vmem:[%s1 + $0x24] sm:$0xf]
      %v154 = vld [vmem:[%s1 + $0x28] sm:$0xf]
      %v155 = vld [vmem:[%s1 + $0x2c] sm:$0xf]
      %v156 = vld [vmem:[%s1 + $0x30] sm:$0xf]
      %v157 = vld [vmem:[%s1 + $0x34] sm:$0xf]
      %v158 = vld [vmem:[%s1 + $0x38] sm:$0xf]
      %v159 = vld [vmem:[%s1 + $0x3c] sm:$0xf]
      %v160 = vld [vmem:[%s1 + $0x40] sm:$0xf]
      %v161 = vld [vmem:[%s1 + $0x44] sm:$0xf]
      %v162 = vld [vmem:[%s1 + $0x48] sm:$0xf]
      %v163 = vld [vmem:[%s1 + $0x4c] sm:$0xf]
      %v164 = vld [vmem:[%s1 + $0x50] sm:$0xf]
      %v165 = vld [vmem:[%s1 + $0x54] sm:$0xf]
      %v166 = vld [vmem:[%s1 + $0x58] sm:$0xf]
      %v167 = vld [vmem:[%s1 + $0x5c] sm:$0xf]
      %v168 = vld [vmem:[%s1 + $0x60] sm:$0xf]
      %v169 = vld [vmem:[%s1 + $0x64] sm:$0xf]
      %v170 = vld [vmem:[%s1 + $0x68] sm:$0xf]
      %v171 = vld [vmem:[%s1 + $0x6c] sm:$0xf]
      %v172 = vld [vmem:[%s1 + $0x70] sm:$0xf]
      %v173 = vld [vmem:[%s1 + $0x74] sm:$0xf]
      %v174 = vld [vmem:[%s1 + $0x78] sm:$0xf]
      %v175 = vld [vmem:[%s1 + $0x7c] sm:$0xf]
      %v177 = vunpack.c.l.b16 %v143
      %v178 = vunpack.c.h.b16 %v143
      %v179 = vpack.c.b16 %v177, %v177
      %v180 = vpack.c.b16 %v178, %v178
      %v215 = vunpack.c.l.b16 %v144
      %v216 = vunpack.c.l.b16 %v145
      %v217 = vunpack.c.l.b16 %v146
      %v218 = vunpack.c.l.b16 %v147
      %v219 = vunpack.c.l.b16 %v148
      %v220 = vunpack.c.l.b16 %v149
      %v221 = vunpack.c.l.b16 %v150
      %v222 = vunpack.c.l.b16 %v151
      %v223 = vunpack.c.l.b16 %v152
      %v224 = vunpack.c.l.b16 %v153
      %v225 = vunpack.c.l.b16 %v154
      %v226 = vunpack.c.l.b16 %v155
      %v227 = vunpack.c.l.b16 %v156
      %v228 = vunpack.c.l.b16 %v157
      %v229 = vunpack.c.l.b16 %v158
      %v230 = vunpack.c.l.b16 %v159
      %v231 = vunpack.c.l.b16 %v160
      %v232 = vunpack.c.l.b16 %v161
      %v233 = vunpack.c.l.b16 %v162
      %v234 = vunpack.c.l.b16 %v163
      %v235 = vunpack.c.l.b16 %v164
      %v236 = vunpack.c.l.b16 %v165
      %v237 = vunpack.c.l.b16 %v166
      %v238 = vunpack.c.l.b16 %v167
      %v239 = vunpack.c.l.b16 %v168
      %v240 = vunpack.c.l.b16 %v169
      %v241 = vunpack.c.l.b16 %v170
      %v242 = vunpack.c.l.b16 %v171
      %v243 = vunpack.c.l.b16 %v172
      %v244 = vunpack.c.l.b16 %v173
      %v245 = vunpack.c.l.b16 %v174
      %v246 = vunpack.c.l.b16 %v175
      %v247 = vpack.c.b16 %v216, %v215
      %v248 = vpack.c.b16 %v218, %v217
      %v249 = vpack.c.b16 %v220, %v219
      %v250 = vpack.c.b16 %v222, %v221
      %v251 = vpack.c.b16 %v224, %v223
      %v252 = vpack.c.b16 %v226, %v225
      %v253 = vpack.c.b16 %v228, %v227
      %v254 = vpack.c.b16 %v230, %v229
      %v255 = vpack.c.b16 %v232, %v231
      %v256 = vpack.c.b16 %v234, %v233
      %v257 = vpack.c.b16 %v236, %v235
      %v258 = vpack.c.b16 %v238, %v237
      %v259 = vpack.c.b16 %v240, %v239
      %v260 = vpack.c.b16 %v242, %v241
      %v261 = vpack.c.b16 %v244, %v243
      %v262 = vpack.c.b16 %v246, %v245
      %279 = vmatprep.subr.bf16.mxu0 0
      %280 = vmatpush1.bf16.msra.mxu0 %v247
      %281 = vmatprep.subr.bf16.mxu0 0
      %282 = vmatpush1.bf16.msra.mxu0 %v248
      %283 = vmatprep.subr.bf16.mxu0 0
      %284 = vmatpush1.bf16.msra.mxu0 %v249
      %285 = vmatprep.subr.bf16.mxu0 0
      %286 = vmatpush1.bf16.msra.mxu0 %v250
      %287 = vmatprep.subr.bf16.mxu0 0
      %288 = vmatpush1.bf16.msra.mxu0 %v251
      %289 = vmatprep.subr.bf16.mxu0 0
      %290 = vmatpush1.bf16.msra.mxu0 %v252
      %291 = vmatprep.subr.bf16.mxu0 0
      %292 = vmatpush1.bf16.msra.mxu0 %v253
      %293 = vmatprep.subr.bf16.mxu0 0
      %294 = vmatpush1.bf16.msra.mxu0 %v254
      %295 = vmatprep.subr.bf16.mxu0 0
      %296 = vmatpush1.bf16.msra.mxu0 %v255
      %297 = vmatprep.subr.bf16.mxu0 0
      %298 = vmatpush1.bf16.msra.mxu0 %v256
      %299 = vmatprep.subr.bf16.mxu0 0
      %300 = vmatpush1.bf16.msra.mxu0 %v257
      %301 = vmatprep.subr.bf16.mxu0 0
      %302 = vmatpush1.bf16.msra.mxu0 %v258
      %303 = vmatprep.subr.bf16.mxu0 0
      %304 = vmatpush1.bf16.msra.mxu0 %v259
      %305 = vmatprep.subr.bf16.mxu0 0
      %306 = vmatpush1.bf16.msra.mxu0 %v260
      %307 = vmatprep.subr.bf16.mxu0 0
      %308 = vmatpush1.bf16.msra.mxu0 %v261
      %309 = vmatprep.subr.bf16.mxu0 0
      %310 = vmatpush1.bf16.msra.mxu0 %v262
      %311 = vmatprep.mubr.bf16.mxu0 %v180
      %312 = vmatmul.mubr.bf16.gmra.mrb[0].mxu0 %v179
      %v313 = vpop.f32.mrb[0].mxu0
      %v314 = vadd.f32 0.0, %v313
      %v315 = vpop.f32.mrb[0].mxu0
      %v316 = vpop.f32.mrb[0].mxu0
      %v317 = vpop.f32.mrb[0].mxu0
      %318 = vdwg.mxu0
      %v319 = vrot.slane %v314, 4
      %v320 = vadd.f32 %v314, %v319
      %v321 = vrot.slane %v320, 2
      %v322 = vadd.f32 %v320, %v321
      %v323 = vrot.slane %v322, 1
      %v324 = vadd.f32 %v322, %v323
      %v325 = vmul.f32 %v314, %v314
      %v326 = vrot.slane %v325, 4
      %v327 = vadd.f32 %v325, %v326
      %v328 = vrot.slane %v327, 2
      %v329 = vadd.f32 %v327, %v328
      %v330 = vrot.slane %v329, 1
      %v331 = vadd.f32 %v329, %v330
      %vm332 = vcmask 1040384
      %v333 = vsel %vm332, %v324, %v331
      %vm334 = vcmask 1041408
      %v335 = vsel %vm334, %v333, 0.0
      %336 = vst [vmem:[%s141] sm:$0xff] %v335
      %p337 = scmp.lt.s32.totalorder %s13, 3
      %s338 = scalar_select %p337, %s13, 3
      %s339 = smul.addr %s338, 8
      %s340 = scalar_lea.vmem %s2, %s339
      // Predicated region
      $region29: #{discriminator_forward.8} parent=27 // pred_check
        %p341 = pneg %p78
      $region30: #{discriminator_forward.8} parent=27 // pred_check_branch
        %343 = sbr.rel (%p341) target = $region32
      $region31: #{discriminator_forward.8} parent=27 // pred_region
        _
      $region32: #{discriminator_forward.8} parent=27 // pred_fallthru
        _
    $region28: #{discriminator_forward.8} parent=5 // pred_fallthru
      _
    %p344 = scmp.le.s32.totalorder 2, %s8
    // Predicated region
    $region33: #{discriminator_forward.8} parent=5 // pred_check
      %p345 = pneg %p344
    $region34: #{discriminator_forward.8} parent=5 // pred_check_branch
      %347 = sbr.rel (%p345) target = $region36
    $region35: #{discriminator_forward.8} parent=5 // pred_region
      %s348 = ssub.s32 %s8, 2
      // Predicated region
      $region37: #{discriminator_forward.8} parent=35 // pred_check
        %p349 = pneg %p84
      $region38: #{discriminator_forward.8} parent=35 // pred_check_branch
        %351 = sbr.rel (%p349) target = $region40
      $region39: #{discriminator_forward.8} parent=35 // pred_region
        %p352 = scmp.lt.s32.totalorder %s14, 3
        %s353 = scalar_select %p352, %s14, 3
        %s354 = smul.addr %s353, 8
        %s355 = scalar_lea.vmem %s2, %s354
      $region40: #{discriminator_forward.8} parent=35 // pred_fallthru
        _
    $region36: #{discriminator_forward.8} parent=5 // pred_fallthru
      _
  $region6: #{discriminator_forward.8} parent=0 // loop_footer
    %s12 = sadd.s32 1, %s8
  $region7: #{discriminator_forward.8} parent=0 // loop_footer_branch
    %7 = sbr.rel target = $region3
  $region8: #{discriminator_forward.8} parent=0 // loop_exit
    _

// kernel: discriminator_forward.9
$region0: #{discriminator_forward.9}
  #allocation0 [shape = 'u32[]', space=smem, size = 0x4, offset = 0x4, fixed_abs, tag = 'smem constant byte address 0x4 - core index']
  #allocation1 [shape = 'u32[144,128]{1,0:T(1,128)}', space=vmem, size = 0x12000, scoped, tag = 'internal scratch']
  %s0 = inlined_call_operand.vmem [shape: bf16[32,256], index: 0, kind: input, shape index: {}]
  %s1 = inlined_call_operand.vmem [shape: bf16[256,128], index: 1, kind: input, shape index: {}]
  %s2 = inlined_call_operand.vmem [shape: f32[1,128], index: 2, kind: input, shape index: {}]
  %s3 = inlined_call_operand.vmem [shape: f32[1,128], index: 3, kind: input, shape index: {}]
  %s4 = inlined_call_operand.vmem [shape: bf16[32,128], index: 4, kind: output, shape index: {}]
  %s5 = sld [smem:[#allocation0]]
  $region49: #{discriminator_forward.9} parent=0
    _
  %s7 = ssub.s32 1, %s5
  %s8 = scalar_select 0, %s7, %s5
  loop: start=0, step=1, limit=6
  $region2: #{discriminator_forward.9} parent=0 // loop_pre_header
    _
  $region3: #{discriminator_forward.9} parent=0 // loop_header
    %s10 = sphi 0, %s14
    %p11 = scmp.ge.s32.totalorder %s10, 6
    %s20 = sphi 0, %s22
    %s23 = sphi 0, %s20
    %s24 = sphi 0, %s23
    %s40 = sphi 0, %s24
    %s44 = sphi 0, %s44
    %s46 = sphi 0, %s44
    %s47 = sphi 0, %s46
    %s61 = sphi 0, %s47
    %s65 = sphi 0, %s65
    %s67 = sphi 0, %s65
    %s68 = sphi 0, %s67
    %s82 = sphi 0, %s68
    %s86 = sphi 0, %s86
    %s88 = sphi 0, %s86
    %s89 = sphi 0, %s88
    %s103 = sphi 0, %s89
    %s109 = sphi 0, %s111
    %s112 = sphi 0, %s109
    %s113 = sphi 0, %s112
    %s129 = sphi 0, %s113
  $region4: #{discriminator_forward.9} parent=0 // loop_header_branch
    %13 = sbr.rel (%p11) target = $region8
  $region5: #{discriminator_forward.9} parent=0 // loop_body
    %s15 = ssub.s32 %s10, 1
    %s16 = ssub.s32 %s10, 2
    %s17 = sadd.s32 %s10, 1
    %s18 = ssub.s32 %s10, %s17
    %p19 = scmp.eq.s32.totalorder %s18, 0
    %s21 = sadd.s32 %s20, 1
    %s22 = scalar_select %p19, %s20, %s21
    %p25 = pneg %p19
    %p26 = scmp.eq.s32.totalorder %s10, 3
    %p27 = por %p25, %p26
    %p28 = scmp.ne.s32.totalorder %s20, %s23
    %p29 = scmp.eq.s32.totalorder %s10, 0
    %p30 = por %p28, %p29
    %p31 = scmp.ne.s32.totalorder %s20, %s23
    %p32 = scmp.eq.s32.totalorder %s15, 3
    %p33 = por %p31, %p32
    %p34 = scmp.ne.s32.totalorder %s23, %s24
    %p35 = scmp.eq.s32.totalorder %s15, 0
    %p36 = por %p34, %p35
    %p37 = scmp.ne.s32.totalorder %s23, %s24
    %p38 = scmp.eq.s32.totalorder %s16, 3
    %p39 = por %p37, %p38
    %p41 = scmp.ne.s32.totalorder %s24, %s40
    %p42 = scmp.eq.s32.totalorder %s16, 0
    %p43 = por %p41, %p42
    %s45 = sadd.s32 %s44, 1
    %p48 = scmp.eq.s32.totalorder %s10, 3
    %p49 = scmp.ne.s32.totalorder %s44, %s46
    %p50 = scmp.eq.s32.totalorder %s10, 0
    %p51 = por %p49, %p50
    %p52 = scmp.ne.s32.totalorder %s44, %s46
    %p53 = scmp.eq.s32.totalorder %s15, 3
    %p54 = por %p52, %p53
    %p55 = scmp.ne.s32.totalorder %s46, %s47
    %p56 = scmp.eq.s32.totalorder %s15, 0
    %p57 = por %p55, %p56
    %p58 = scmp.ne.s32.totalorder %s46, %s47
    %p59 = scmp.eq.s32.totalorder %s16, 3
    %p60 = por %p58, %p59
    %p62 = scmp.ne.s32.totalorder %s47, %s61
    %p63 = scmp.eq.s32.totalorder %s16, 0
    %p64 = por %p62, %p63
    %s66 = sadd.s32 %s65, 1
    %p69 = scmp.eq.s32.totalorder %s10, 3
    %p70 = scmp.ne.s32.totalorder %s65, %s67
    %p71 = scmp.eq.s32.totalorder %s10, 0
    %p72 = por %p70, %p71
    %p73 = scmp.ne.s32.totalorder %s65, %s67
    %p74 = scmp.eq.s32.totalorder %s15, 3
    %p75 = por %p73, %p74
    %p76 = scmp.ne.s32.totalorder %s67, %s68
    %p77 = scmp.eq.s32.totalorder %s15, 0
    %p78 = por %p76, %p77
    %p79 = scmp.ne.s32.totalorder %s67, %s68
    %p80 = scmp.eq.s32.totalorder %s16, 3
    %p81 = por %p79, %p80
    %p83 = scmp.ne.s32.totalorder %s68, %s82
    %p84 = scmp.eq.s32.totalorder %s16, 0
    %p85 = por %p83, %p84
    %s87 = sadd.s32 %s86, 1
    %p90 = scmp.eq.s32.totalorder %s10, 3
    %p91 = scmp.ne.s32.totalorder %s86, %s88
    %p92 = scmp.eq.s32.totalorder %s10, 0
    %p93 = por %p91, %p92
    %p94 = scmp.ne.s32.totalorder %s86, %s88
    %p95 = scmp.eq.s32.totalorder %s15, 3
    %p96 = por %p94, %p95
    %p97 = scmp.ne.s32.totalorder %s88, %s89
    %p98 = scmp.eq.s32.totalorder %s15, 0
    %p99 = por %p97, %p98
    %p100 = scmp.ne.s32.totalorder %s88, %s89
    %p101 = scmp.eq.s32.totalorder %s16, 3
    %p102 = por %p100, %p101
    %p104 = scmp.ne.s32.totalorder %s89, %s103
    %p105 = scmp.eq.s32.totalorder %s16, 0
    %p106 = por %p104, %p105
    %s107 = ssub.s32 %s10, %s17
    %p108 = scmp.eq.s32.totalorder %s107, 0
    %s110 = sadd.s32 %s109, 1
    %s111 = scalar_select %p108, %s109, %s110
    %p114 = pneg %p108
    %p115 = scmp.eq.s32.totalorder %s10, 3
    %p116 = por %p114, %p115
    %p117 = scmp.ne.s32.totalorder %s109, %s112
    %p118 = scmp.eq.s32.totalorder %s10, 0
    %p119 = por %p117, %p118
    %p120 = scmp.ne.s32.totalorder %s109, %s112
    %p121 = scmp.eq.s32.totalorder %s15, 3
    %p122 = por %p120, %p121
    %p123 = scmp.ne.s32.totalorder %s112, %s113
    %p124 = scmp.eq.s32.totalorder %s15, 0
    %p125 = por %p123, %p124
    %p126 = scmp.ne.s32.totalorder %s112, %s113
    %p127 = scmp.eq.s32.totalorder %s16, 3
    %p128 = por %p126, %p127
    %p130 = scmp.ne.s32.totalorder %s113, %s129
    %p131 = scmp.eq.s32.totalorder %s16, 0
    %p132 = por %p130, %p131
    %p133 = scmp.le.s32.totalorder 1, %s10
    %p134 = scmp.lt.s32.totalorder %s10, 5
    %p135 = pnand %p133, %p134
    %p136 = pneg %p135
    // Predicated region
    $region9: #{discriminator_forward.9} parent=5 // pred_check
      _
    $region10: #{discriminator_forward.9} parent=5 // pred_check_branch
      %138 = sbr.rel (%p135) target = $region12
    $region11: #{discriminator_forward.9} parent=5 // pred_region
      %s139 = ssub.s32 %s10, 1
      // Predicated region
      $region13: #{discriminator_forward.9} parent=11 // pred_check
        %p140 = pneg %p57
      $region14: #{discriminator_forward.9} parent=11 // pred_check_branch
        %142 = sbr.rel (%p140) target = $region16
      $region15: #{discriminator_forward.9} parent=11 // pred_region
        _
      $region16: #{discriminator_forward.9} parent=11 // pred_fallthru
        _
      // Predicated region
      $region17: #{discriminator_forward.9} parent=11 // pred_check
        %p143 = pneg %p78
      $region18: #{discriminator_forward.9} parent=11 // pred_check_branch
        %145 = sbr.rel (%p143) target = $region20
      $region19: #{discriminator_forward.9} parent=11 // pred_region
        _
      $region20: #{discriminator_forward.9} parent=11 // pred_fallthru
        _
      // Predicated region
      $region21: #{discriminator_forward.9} parent=11 // pred_check
        %p146 = pneg %p99
      $region22: #{discriminator_forward.9} parent=11 // pred_check_branch
        %148 = sbr.rel (%p146) target = $region24
      $region23: #{discriminator_forward.9} parent=11 // pred_region
        _
      $region24: #{discriminator_forward.9} parent=11 // pred_fallthru
        _
    $region12: #{discriminator_forward.9} parent=5 // pred_fallthru
      _
    %p149 = scmp.lt.s32.totalorder %s10, 4
    // Predicated region
    $region25: #{discriminator_forward.9} parent=5 // pred_check
      %p150 = pneg %p149
    $region26: #{discriminator_forward.9} parent=5 // pred_check_branch
      %152 = sbr.rel (%p150) target = $region28
    $region27: #{discriminator_forward.9} parent=5 // pred_region
      // Predicated region
      $region29: #{discriminator_forward.9} parent=27 // pred_check
        %p153 = pneg %p30
      $region30: #{discriminator_forward.9} parent=27 // pred_check_branch
        %155 = sbr.rel (%p153) target = $region32
      $region31: #{discriminator_forward.9} parent=27 // pred_region
        %p156 = scmp.lt.s32.totalorder %s10, 3
        %s157 = scalar_select %p156, %s10, 3
        %s158 = smul.addr %s157, 2
        %s159 = smul.addr %s158, 4
        %s160 = scalar_lea.vmem %s0, %s159
      $region32: #{discriminator_forward.9} parent=27 // pred_fallthru
        _
    $region28: #{discriminator_forward.9} parent=5 // pred_fallthru
      _
    %p161 = scmp.le.s32.totalorder 1, %s10
    %p162 = scmp.lt.s32.totalorder %s10, 5
    %p163 = pnand %p161, %p162
    %p164 = pneg %p163
    // Predicated region
    $region33: #{discriminator_forward.9} parent=5 // pred_check
      _
    $region34: #{discriminator_forward.9} parent=5 // pred_check_branch
      %166 = sbr.rel (%p163) target = $region36
    $region35: #{discriminator_forward.9} parent=5 // pred_region
      %s167 = ssub.s32 %s10, 1
      %p168 = scmp.lt.s32.totalorder %s15, 3
      %s169 = scalar_select %p168, %s15, 3
      %s170 = smul.addr %s169, 2
      %s171 = smul.addr %s170, 4
      %s172 = scalar_lea.vmem %s0, %s171
      %p173 = pneg %p36
      %p174 = pneg %p33
      %p175 = pneg %p57
      %p176 = pneg %p54
      %p177 = pneg %p78
      %p178 = pneg %p75
      %p179 = pneg %p99
      %p180 = pneg %p96
      %p181 = pneg %p125
      %p182 = pneg %p122
      %p183 = scmp.lt.s32.totalorder %s15, 3
      %s184 = scalar_select %p183, %s15, 3
      %s185 = smul.addr %s184, 4
      %s186 = scalar_lea.vmem %s4, %s185
      %p187 = scmp.lt.s32.totalorder %s15, 3
      %s188 = scalar_select %p187, %s15, 3
      %s189 = smul.addr %s188, 2
      %s190 = smul.addr %s189, 4
      %s191 = scalar_lea.vmem %s0, %s190
      %p192 = scmp.lt.s32.totalorder %s15, 3
      %s193 = scalar_select %p192, %s15, 3
      %s194 = smul.addr %s193, 4
      %s195 = scalar_lea.vmem %s4, %s194
      %v197 = vld [vmem:[%s191] sm:$0xff]
      %v198 = vld [vmem:[%s1] sm:$0xf]
      %v199 = vld [vmem:[%s1 + $0x4] sm:$0xf]
      %v200 = vld [vmem:[%s1 + $0x8] sm:$0xf]
      %v201 = vld [vmem:[%s1 + $0xc] sm:$0xf]
      %v202 = vld [vmem:[%s1 + $0x10] sm:$0xf]
      %v203 = vld [vmem:[%s1 + $0x14] sm:$0xf]
      %v204 = vld [vmem:[%s1 + $0x18] sm:$0xf]
      %v205 = vld [vmem:[%s1 + $0x1c] sm:$0xf]
      %v206 = vld [vmem:[%s1 + $0x20] sm:$0xf]
      %v207 = vld [vmem:[%s1 + $0x24] sm:$0xf]
      %v208 = vld [vmem:[%s1 + $0x28] sm:$0xf]
      %v209 = vld [vmem:[%s1 + $0x2c] sm:$0xf]
      %v210 = vld [vmem:[%s1 + $0x30] sm:$0xf]
      %v211 = vld [vmem:[%s1 + $0x34] sm:$0xf]
      %v212 = vld [vmem:[%s1 + $0x38] sm:$0xf]
      %v213 = vld [vmem:[%s1 + $0x3c] sm:$0xf]
      %v214 = vld [vmem:[%s1 + $0x40] sm:$0xf]
      %v215 = vld [vmem:[%s1 + $0x44] sm:$0xf]
      %v216 = vld [vmem:[%s1 + $0x48] sm:$0xf]
      %v217 = vld [vmem:[%s1 + $0x4c] sm:$0xf]
      %v218 = vld [vmem:[%s1 + $0x50] sm:$0xf]
      %v219 = vld [vmem:[%s1 + $0x54] sm:$0xf]
      %v220 = vld [vmem:[%s1 + $0x58] sm:$0xf]
      %v221 = vld [vmem:[%s1 + $0x5c] sm:$0xf]
      %v222 = vld [vmem:[%s1 + $0x60] sm:$0xf]
      %v223 = vld [vmem:[%s1 + $0x64] sm:$0xf]
      %v224 = vld [vmem:[%s1 + $0x68] sm:$0xf]
      %v225 = vld [vmem:[%s1 + $0x6c] sm:$0xf]
      %v226 = vld [vmem:[%s1 + $0x70] sm:$0xf]
      %v227 = vld [vmem:[%s1 + $0x74] sm:$0xf]
      %v228 = vld [vmem:[%s1 + $0x78] sm:$0xf]
      %v229 = vld [vmem:[%s1 + $0x7c] sm:$0xf]
      %v231 = vunpack.c.l.b16 %v197
      %v232 = vunpack.c.h.b16 %v197
      %v233 = vpack.c.b16 %v231, %v231
      %v234 = vpack.c.b16 %v232, %v232
      %v269 = vunpack.c.l.b16 %v198
      %v270 = vunpack.c.l.b16 %v199
      %v271 = vunpack.c.l.b16 %v200
      %v272 = vunpack.c.l.b16 %v201
      %v273 = vunpack.c.l.b16 %v202
      %v274 = vunpack.c.l.b16 %v203
      %v275 = vunpack.c.l.b16 %v204
      %v276 = vunpack.c.l.b16 %v205
      %v277 = vunpack.c.l.b16 %v206
      %v278 = vunpack.c.l.b16 %v207
      %v279 = vunpack.c.l.b16 %v208
      %v280 = vunpack.c.l.b16 %v209
      %v281 = vunpack.c.l.b16 %v210
      %v282 = vunpack.c.l.b16 %v211
      %v283 = vunpack.c.l.b16 %v212
      %v284 = vunpack.c.l.b16 %v213
      %v285 = vunpack.c.l.b16 %v214
      %v286 = vunpack.c.l.b16 %v215
      %v287 = vunpack.c.l.b16 %v216
      %v288 = vunpack.c.l.b16 %v217
      %v289 = vunpack.c.l.b16 %v218
      %v290 = vunpack.c.l.b16 %v219
      %v291 = vunpack.c.l.b16 %v220
      %v292 = vunpack.c.l.b16 %v221
      %v293 = vunpack.c.l.b16 %v222
      %v294 = vunpack.c.l.b16 %v223
      %v295 = vunpack.c.l.b16 %v224
      %v296 = vunpack.c.l.b16 %v225
      %v297 = vunpack.c.l.b16 %v226
      %v298 = vunpack.c.l.b16 %v227
      %v299 = vunpack.c.l.b16 %v228
      %v300 = vunpack.c.l.b16 %v229
      %v301 = vpack.c.b16 %v270, %v269
      %v302 = vpack.c.b16 %v272, %v271
      %v303 = vpack.c.b16 %v274, %v273
      %v304 = vpack.c.b16 %v276, %v275
      %v305 = vpack.c.b16 %v278, %v277
      %v306 = vpack.c.b16 %v280, %v279
      %v307 = vpack.c.b16 %v282, %v281
      %v308 = vpack.c.b16 %v284, %v283
      %v309 = vpack.c.b16 %v286, %v285
      %v310 = vpack.c.b16 %v288, %v287
      %v311 = vpack.c.b16 %v290, %v289
      %v312 = vpack.c.b16 %v292, %v291
      %v313 = vpack.c.b16 %v294, %v293
      %v314 = vpack.c.b16 %v296, %v295
      %v315 = vpack.c.b16 %v298, %v297
      %v316 = vpack.c.b16 %v300, %v299
      %333 = vmatprep.subr.bf16.mxu0 0
      %334 = vmatpush1.bf16.msra.mxu0 %v301
      %335 = vmatprep.subr.bf16.mxu0 0
      %336 = vmatpush1.bf16.msra.mxu0 %v302
      %337 = vmatprep.subr.bf16.mxu0 0
      %338 = vmatpush1.bf16.msra.mxu0 %v303
      %339 = vmatprep.subr.bf16.mxu0 0
      %340 = vmatpush1.bf16.msra.mxu0 %v304
      %341 = vmatprep.subr.bf16.mxu0 0
      %342 = vmatpush1.bf16.msra.mxu0 %v305
      %343 = vmatprep.subr.bf16.mxu0 0
      %344 = vmatpush1.bf16.msra.mxu0 %v306
      %345 = vmatprep.subr.bf16.mxu0 0
      %346 = vmatpush1.bf16.msra.mxu0 %v307
      %347 = vmatprep.subr.bf16.mxu0 0
      %348 = vmatpush1.bf16.msra.mxu0 %v308
      %349 = vmatprep.subr.bf16.mxu0 0
      %350 = vmatpush1.bf16.msra.mxu0 %v309
      %351 = vmatprep.subr.bf16.mxu0 0
      %352 = vmatpush1.bf16.msra.mxu0 %v310
      %353 = vmatprep.subr.bf16.mxu0 0
      %354 = vmatpush1.bf16.msra.mxu0 %v311
      %355 = vmatprep.subr.bf16.mxu0 0
      %356 = vmatpush1.bf16.msra.mxu0 %v312
      %357 = vmatprep.subr.bf16.mxu0 0
      %358 = vmatpush1.bf16.msra.mxu0 %v313
      %359 = vmatprep.subr.bf16.mxu0 0
      %360 = vmatpush1.bf16.msra.mxu0 %v314
      %361 = vmatprep.subr.bf16.mxu0 0
      %362 = vmatpush1.bf16.msra.mxu0 %v315
      %363 = vmatprep.subr.bf16.mxu0 0
      %364 = vmatpush1.bf16.msra.mxu0 %v316
      %365 = vmatprep.mubr.bf16.mxu0 %v234
      %366 = vmatmul.mubr.bf16.gmra.mrb[0].mxu0 %v233
      %v367 = vpop.f32.mrb[0].mxu0
      %v368 = vadd.f32 0.0, %v367
      %v369 = vpop.f32.mrb[0].mxu0
      %v370 = vpop.f32.mrb[0].mxu0
      %v371 = vpop.f32.mrb[0].mxu0
      %372 = vdwg.mxu0
      %v373 = vld [vmem:[%s2] sm:$0x1]
      %v375 = vlaneseq
      %v376 = vshrl.u32 %v375, 7
      %v377 = vsub.s32 0, %v376
      %v378 = vrot.slane %v373, %v377
      %v380 = vmul.f32 %v368, %v378
      %v381 = vld [vmem:[%s3] sm:$0x1]
      %v383 = vlaneseq
      %v384 = vshrl.u32 %v383, 7
      %v385 = vsub.s32 0, %v384
      %v386 = vrot.slane %v381, %v385
      %v388 = vadd.f32 %v380, %v386
      %vm389 = vcmp.gt.f32.partialorder %v388, 0.0
      %v390 = vmul.f32 %v388, 0.2
      %v391 = vsel %vm389, %v388, %v390
      %v392 = vpack.c.bf16 %v391, %v391
      %393 = vst [vmem:[%s195] sm:$0xf] %v392
      %p394 = scmp.lt.s32.totalorder %s15, 3
      %s395 = scalar_select %p394, %s15, 3
      %s396 = smul.addr %s395, 4
      %s397 = scalar_lea.vmem %s4, %s396
      // Predicated region
      $region37: #{discriminator_forward.9} parent=35 // pred_check
        %p398 = pneg %p122
      $region38: #{discriminator_forward.9} parent=35 // pred_check_branch
        %400 = sbr.rel (%p398) target = $region40
      $region39: #{discriminator_forward.9} parent=35 // pred_region
        _
      $region40: #{discriminator_forward.9} parent=35 // pred_fallthru
        _
    $region36: #{discriminator_forward.9} parent=5 // pred_fallthru
      _
    %p401 = scmp.le.s32.totalorder 2, %s10
    // Predicated region
    $region41: #{discriminator_forward.9} parent=5 // pred_check
      %p402 = pneg %p401
    $region42: #{discriminator_forward.9} parent=5 // pred_check_branch
      %404 = sbr.rel (%p402) target = $region44
    $region43: #{discriminator_forward.9} parent=5 // pred_region
      %s405 = ssub.s32 %s10, 2
      // Predicated region
      $region45: #{discriminator_forward.9} parent=43 // pred_check
        %p406 = pneg %p128
      $region46: #{discriminator_forward.9} parent=43 // pred_check_branch
        %408 = sbr.rel (%p406) target = $region48
      $region47: #{discriminator_forward.9} parent=43 // pred_region
        %p409 = scmp.lt.s32.totalorder %s16, 3
        %s410 = scalar_select %p409, %s16, 3
        %s411 = smul.addr %s410, 4
        %s412 = scalar_lea.vmem %s4, %s411
      $region48: #{discriminator_forward.9} parent=43 // pred_fallthru
        _
    $region44: #{discriminator_forward.9} parent=5 // pred_fallthru
      _
  $region6: #{discriminator_forward.9} parent=0 // loop_footer
    %s14 = sadd.s32 1, %s10
  $region7: #{discriminator_forward.9} parent=0 // loop_footer_branch
    %9 = sbr.rel target = $region3
  $region8: #{discriminator_forward.9} parent=0 // loop_exit
    _

</llo_original>
